<compile_context>
chip_gen: v7x
topology: tpu7x:2x2x1
jax: 0.10.0
libtpu: 0.0.40
codegen_flags: <defaults>
</compile_context>

<pallas_src>
import functools

import jax
import jax.numpy as jnp
import numpy as np
from jax import lax
from jax.experimental import pallas as pl
from jax.experimental.pallas import tpu as pltpu

# Off-center tap offsets of the 5-tap axial convolutions.  The center tap is
# folded (together with dw_conv, the identity add and eval-mode BN) into the
# per-channel coefficient c0.
_TAPS = (-2, -1, 1, 2)


def _encoder_kernel(x_ref, ctap_ref, c0_ref, cb_ref, w1_ref, w2_ref, wpw_ref,
                    bpw_ref, sel_ref, skip_ref, pool_ref, *, Bt, W, HW,
                    shifts, matmul_dtype):
    """One grid step: Bt images, each laid out as (C, H*W) (lane-dense)."""

    def per_image(b, carry):
        xb = x_ref[b].astype(jnp.float32)                     # (C, HW)

        # ---- x1 + x2 + x3 + identity with eval-mode BN folded in:
        #      per-channel center coefficient + 8 rolled off-center taps.
        #      The zero-padding boundary masks are pre-multiplied into ctap
        #      on the host, so each tap is roll (XLU) + one mul + one add. ----
        acc = xb * c0_ref[...] + cb_ref[...]                  # (C,1) broadcast
        for j, shift in enumerate(shifts):                    # static, 8 taps
            acc = acc + pltpu.roll(xb, shift, axis=1) * ctap_ref[j]
        y = jnp.maximum(acc, 0.0)                             # ReLU(BN(.))

        # ---- CALayer: global average pool -> tiny MLP -> sigmoid gate.
        #      Column-oriented (no transpose); 1/(H*W) folded into w1. ----
        s = jnp.sum(y, axis=1, keepdims=True)                 # (C, 1)
        h = jnp.maximum(
            jnp.dot(w1_ref[...], s, preferred_element_type=jnp.float32), 0.0)
        a = jnp.dot(w2_ref[...], h, preferred_element_type=jnp.float32)
        att = 1.0 / (1.0 + jnp.exp(-a))                       # sigmoid, (C, 1)
        z = (y * att).astype(matmul_dtype)                    # cast at MXU edge

        # ---- pointwise 1x1 conv (MXU, weights pre-cast on host) + ReLU ----
        o = jnp.dot(wpw_ref[...], z,
                    preferred_element_type=jnp.float32) + bpw_ref[...]
        o = jnp.maximum(o, 0.0)                               # (Cout, HW)
        skip_ref[b] = o.astype(skip_ref.dtype)                # lane-dense store

        # ---- 2x2/2 max pool: pairwise roll-maxima (XLU), then compact the
        #      kept (even-row, even-col) lanes with a 0/1 selection matmul.
        #      Wrap-around lanes are never selected, so the rolls are safe.
        #      NOTE: sel matmul is O(HW^2); fine for small feature maps only. --
        m1 = jnp.maximum(o, pltpu.roll(o, HW - 1, axis=1))      # max(p, p+1)
        m2 = jnp.maximum(m1, pltpu.roll(m1, HW - W, axis=1))    # + row below
        pool_ref[b] = jnp.dot(m2.astype(matmul_dtype), sel_ref[...],
                              preferred_element_type=jnp.float32
                              ).astype(pool_ref.dtype)
        return carry

    # lax.fori_loop (not a static Python loop) bounds live ranges to a single
    # image's temporaries (~8 vregs per f32 temp at C=32, HW=256), so the tap
    # stage never spills regardless of how large the batch tile Bt is.
    lax.fori_loop(0, Bt, per_image, 0)


def _pick_batch_tile(B, max_batch_tile, min_grid_steps):
    """Largest divisor of B (<= max_batch_tile) leaving >= min_grid_steps steps."""
    divisors = [d for d in range(1, min(B, max_batch_tile) + 1) if B % d == 0]
    for want in (min_grid_steps, 2, 1):
        ok = [d for d in divisors if B // d >= want]
        if ok:
            return max(ok)
    return 1


def encoder_block_v4(x_nchw, params, *, eps=1e-5,
                     matmul_dtype=jnp.bfloat16,   # jnp.float32 for exactness
                     max_batch_tile=8, min_grid_steps=4):
    B, C, H, W = x_nchw.shape
    assert H % 2 == 0 and W % 2 == 0
    Cout = params['wpw'].shape[0]
    HW = H * W
    HWp = (H // 2) * (W // 2)

    # ---- fold dw_conv, identity, center taps, conv biases and eval-mode BN
    #      into per-channel coefficients (host side) ----
    bn_s = params['bn_gamma'] / jnp.sqrt(params['bn_var'] + eps)
    bn_b = params['bn_beta'] - params['bn_mean'] * bn_s
    kh, kv = params['kh'], params['kv']                              # (C, 5)
    c0 = (bn_s * (params['dw_w'] + 1.0 + kh[:, 2] + kv[:, 2])).reshape(C, 1)
    cb = (bn_s * (params['dw_b'] + params['hb'] + params['vb'])
          + bn_b).reshape(C, 1)
    ch = jnp.stack([bn_s * kh[:, d + 2] for d in _TAPS], axis=1)     # (C, 4)
    cv = jnp.stack([bn_s * kv[:, d + 2] for d in _TAPS], axis=1)     # (C, 4)

    # ---- zero-padding boundary masks folded into the tap coefficients:
    #      ctap[j] = coeff[:, j] * mask[j]   (one multiply per tap in-kernel)
    p = np.arange(HW)
    col = p % W
    hmask = np.stack([(col + d >= 0) & (col + d < W) for d in _TAPS]
                     ).astype(np.float32)                            # (4, HW)
    vmask = np.stack([(p + d * W >= 0) & (p + d * W < HW) for d in _TAPS]
                     ).astype(np.float32)                            # (4, HW)
    ctap = jnp.concatenate(
        [ch.T[:, :, None] * jnp.asarray(hmask)[:, None, :],
         cv.T[:, :, None] * jnp.asarray(vmask)[:, None, :]],
        axis=0).astype(jnp.float32)                                  # (8,C,HW)
    shifts = tuple([(-d) % HW for d in _TAPS]
                   + [(-d * W) % HW for d in _TAPS])

    # ---- 0/1 pool-selection matrix: lane 2*i*W + 2*j -> lane i*(W/2)+j ----
    q = np.arange(HWp)
    src = 2 * W * (q // (W // 2)) + 2 * (q % (W // 2))
    sel_np = np.zeros((HW, HWp), np.float32)
    sel_np[src, q] = 1.0
    sel = jnp.asarray(sel_np).astype(matmul_dtype)        # 0/1: exact in bf16

    # ---- CA MLP weights: column-oriented, hidden dim zero-padded to >=8,
    #      1/(H*W) of the global average pool folded into w1 ----
    Cr = params['w1'].shape[0]
    Crp = max(8, ((Cr + 7) // 8) * 8)
    w1p = jnp.zeros((Crp, C), jnp.float32).at[:Cr, :].set(
        params['w1'] / float(HW))
    w2p = jnp.zeros((C, Crp), jnp.float32).at[:, :Cr].set(params['w2'])

    wpw = params['wpw'].astype(matmul_dtype)              # pre-cast on host
    bpw = params['bpw'].reshape(Cout, 1).astype(jnp.float32)

    # ---- batch tiling: several images per grid step amortize the ~0.35us
    #      per-step pipeline overhead; >= min_grid_steps keeps both v7x
    #      TensorCores fed with >= 2 steps each.  On single-core v5e/v6e,
    #      pass min_grid_steps=1 for one fat grid step. ----
    Bt = _pick_batch_tile(B, max_batch_tile, min_grid_steps)

    x_flat = x_nchw.reshape(B, C, HW)                     # free (contiguous)

    def full_spec(shape):
        nd = len(shape)
        return pl.BlockSpec(shape, lambda i, _nd=nd: (0,) * _nd)

    in_specs = [
        pl.BlockSpec((Bt, C, HW), lambda i: (i, 0, 0)),   # x
        full_spec((8, C, HW)),       # ctap (mask-folded tap coefficients)
        full_spec((C, 1)),           # c0   (center coeff, BN folded)
        full_spec((C, 1)),           # cb   (all biases + BN shift)
        full_spec((Crp, C)),         # w1   (CA MLP, 1/HW folded)
        full_spec((C, Crp)),         # w2   (CA MLP)
        full_spec((Cout, C)),        # wpw  (matmul_dtype)
        full_spec((Cout, 1)),        # bpw
        full_spec((HW, HWp)),        # sel  (matmul_dtype, 0/1)
    ]
    out_specs = (
        pl.BlockSpec((Bt, Cout, HW), lambda i: (i, 0, 0)),
        pl.BlockSpec((Bt, Cout, HWp), lambda i: (i, 0, 0)),
    )
    out_shape = (
        jax.ShapeDtypeStruct((B, Cout, HW), x_nchw.dtype),
        jax.ShapeDtypeStruct((B, Cout, HWp), x_nchw.dtype),
    )

    kernel = functools.partial(_encoder_kernel, Bt=Bt, W=W, HW=HW,
                               shifts=shifts, matmul_dtype=matmul_dtype)

    skip, pooled = pl.pallas_call(
        kernel,
        out_shape=out_shape,
        grid_spec=pltpu.PrefetchScalarGridSpec(
            num_scalar_prefetch=0,
            grid=(B // Bt,),
            in_specs=in_specs,
            out_specs=out_specs,
        ),
        compiler_params=pltpu.CompilerParams(
            dimension_semantics=("parallel",)),   # batch groups independent
    )(x_flat, ctap, c0, cb, w1p, w2p, wpw, bpw, sel)

    return (skip.reshape(B, Cout, H, W),
            pooled.reshape(B, Cout, H // 2, W // 2))


def reference(x, p, eps=1e-5):
    """Pure-JAX NCHW reference mirroring the PyTorch module (BN eval mode)."""
    B, C, H, W = x.shape
    Cout = p['wpw'].shape[0]
    dn = ('NCHW', 'OIHW', 'NCHW')
    x1 = lax.conv_general_dilated(
        x, p['dw_w'].reshape(C, 1, 1, 1), (1, 1), ((0, 0), (0, 0)),
        dimension_numbers=dn, feature_group_count=C
    ) + p['dw_b'].reshape(1, C, 1, 1)
    x2 = lax.conv_general_dilated(
        x, p['kh'].reshape(C, 1, 1, 5), (1, 1), ((0, 0), (2, 2)),
        dimension_numbers=dn, feature_group_count=C
    ) + p['hb'].reshape(1, C, 1, 1)
    x3 = lax.conv_general_dilated(
        x, p['kv'].reshape(C, 1, 5, 1), (1, 1), ((2, 2), (0, 0)),
        dimension_numbers=dn, feature_group_count=C
    ) + p['vb'].reshape(1, C, 1, 1)
    out = x1 + x2 + x3 + x
    bn_s = p['bn_gamma'] / jnp.sqrt(p['bn_var'] + eps)
    bn_b = p['bn_beta'] - p['bn_mean'] * bn_s
    out = jnp.maximum(out * bn_s.reshape(1, C, 1, 1)
                      + bn_b.reshape(1, C, 1, 1), 0.0)
    # CALayer
    m = out.mean(axis=(2, 3))                              # (B, C)
    h = jnp.maximum(m @ p['w1'].T, 0.0)                    # (B, C//16)
    att = jax.nn.sigmoid(h @ p['w2'].T)                    # (B, C)
    out = out * att[:, :, None, None]
    # pointwise conv + ReLU
    o = lax.conv_general_dilated(
        out, p['wpw'].reshape(Cout, C, 1, 1), (1, 1), ((0, 0), (0, 0)),
        dimension_numbers=dn) + p['bpw'].reshape(1, Cout, 1, 1)
    o = jnp.maximum(o, 0.0)
    pooled = lax.reduce_window(o, -jnp.inf, lax.max,
                               (1, 1, 2, 2), (1, 1, 2, 2), 'VALID')
    return o, pooled


if __name__ == "__main__":
    B, C, H, W = 8, 32, 16, 16       # channels >= 16 so CA reduction=16 works
    Cout = 48
    Cr = C // 16

    key = jax.random.PRNGKey(0)
    ks = jax.random.split(key, 16)

    def nrm(k, shape, s=0.1):
        return s * jax.random.normal(k, shape, jnp.float32)

    params = dict(
        dw_w=nrm(ks[0], (C,)), dw_b=nrm(ks[1], (C,), 0.05),
        kh=nrm(ks[2], (C, 5)), hb=nrm(ks[3], (C,), 0.05),
        kv=nrm(ks[4], (C, 5)), vb=nrm(ks[5], (C,), 0.05),
        bn_gamma=1.0 + nrm(ks[6], (C,)), bn_beta=nrm(ks[7], (C,), 0.05),
        bn_mean=nrm(ks[8], (C,), 0.05),
        bn_var=jax.random.uniform(ks[9], (C,), jnp.float32, 0.5, 1.5),
        w1=nrm(ks[10], (Cr, C), 0.2), w2=nrm(ks[11], (C, Cr), 0.2),
        wpw=nrm(ks[12], (Cout, C)), bpw=nrm(ks[13], (Cout,), 0.05),
    )

    # PyTorch-style NCHW input.
    x = jax.random.normal(ks[14], (B, C, H, W), jnp.float32)

    skip, pooled = encoder_block_v4(x, params)       # default: bf16 MXU inputs
    jax.block_until_ready((skip, pooled))

    skip_ref, pooled_ref = reference(x, params)
    assert skip.shape == (B, Cout, H, W)
    assert pooled.shape == (B, Cout, H // 2, W // 2)
    # bf16 MXU inputs (wpw, z, sel, m2) add ~2^-9 relative rounding on the
    # pointwise-conv / pooled outputs; tolerances loosened accordingly.
    assert jnp.allclose(skip, skip_ref, atol=3e-2, rtol=3e-2), "skip mismatch"
    assert jnp.allclose(pooled, pooled_ref, atol=3e-2, rtol=3e-2), "pool mismatch"

    print("KERNEL_OK")
</pallas_src>

<mosaic_0001>
module attributes {stable_mosaic.version = 11 : i64} {
  func.func @_encoder_kernel(%arg0: i32, %arg1: memref<2x32x256xf32, #tpu.memory_space<vmem>>, %arg2: memref<8x32x256xf32, #tpu.memory_space<vmem>>, %arg3: memref<32x1xf32, #tpu.memory_space<vmem>>, %arg4: memref<32x1xf32, #tpu.memory_space<vmem>>, %arg5: memref<8x32xf32, #tpu.memory_space<vmem>>, %arg6: memref<32x8xf32, #tpu.memory_space<vmem>>, %arg7: memref<48x32xbf16, #tpu.memory_space<vmem>>, %arg8: memref<48x1xf32, #tpu.memory_space<vmem>>, %arg9: memref<256x64xbf16, #tpu.memory_space<vmem>>, %arg10: memref<2x48x256xf32, #tpu.memory_space<vmem>>, %arg11: memref<2x48x64xf32, #tpu.memory_space<vmem>>) attributes {dimension_semantics = [#tpu.dimension_semantics<parallel>], iteration_bounds = array<i64: 4>, scalar_prefetch = 0 : i64, scratch_operands = 0 : i64, tpu.core_type = #tpu.core_type<tc>, window_params = [{transform_indices = @transform_0, window_bounds = array<i64: 2, 32, 256>}, {pipeline_mode = #tpu.pipeline_mode<synchronous>, transform_indices = @transform_1, window_bounds = array<i64: 8, 32, 256>}, {pipeline_mode = #tpu.pipeline_mode<synchronous>, transform_indices = @transform_2, window_bounds = array<i64: 32, 1>}, {pipeline_mode = #tpu.pipeline_mode<synchronous>, transform_indices = @transform_3, window_bounds = array<i64: 32, 1>}, {pipeline_mode = #tpu.pipeline_mode<synchronous>, transform_indices = @transform_4, window_bounds = array<i64: 8, 32>}, {pipeline_mode = #tpu.pipeline_mode<synchronous>, transform_indices = @transform_5, window_bounds = array<i64: 32, 8>}, {pipeline_mode = #tpu.pipeline_mode<synchronous>, transform_indices = @transform_6, window_bounds = array<i64: 48, 32>}, {pipeline_mode = #tpu.pipeline_mode<synchronous>, transform_indices = @transform_7, window_bounds = array<i64: 48, 1>}, {pipeline_mode = #tpu.pipeline_mode<synchronous>, transform_indices = @transform_8, window_bounds = array<i64: 256, 64>}, {transform_indices = @transform_9, window_bounds = array<i64: 2, 48, 256>}, {transform_indices = @transform_10, window_bounds = array<i64: 2, 48, 64>}]} {
    %c0_i32 = arith.constant 0 : i32
    %c2_i32 = arith.constant 2 : i32
    %0 = arith.addi %c0_i32, %c2_i32 : i32
    %c1_i32 = arith.constant 1 : i32
    scf.for %arg12 = %c0_i32 to %0 step %c1_i32  : i32 {
      %1 = arith.index_cast %arg12 : i32 to index
      %c0 = arith.constant 0 : index
      %c0_1 = arith.constant 0 : index
      %2 = vector.load %arg1[%1, %c0, %c0_1] : memref<2x32x256xf32, #tpu.memory_space<vmem>>, vector<1x32x256xf32>
      %3 = vector.shape_cast %2 : vector<1x32x256xf32> to vector<32x256xf32>
      %c0_2 = arith.constant 0 : index
      %c0_3 = arith.constant 0 : index
      %4 = vector.load %arg3[%c0_2, %c0_3] : memref<32x1xf32, #tpu.memory_space<vmem>>, vector<32x1xf32>
      %5 = vector.broadcast %4 : vector<32x1xf32> to vector<32x256xf32>
      %6 = arith.mulf %3, %5 : vector<32x256xf32>
      %c0_4 = arith.constant 0 : index
      %c0_5 = arith.constant 0 : index
      %7 = vector.load %arg4[%c0_4, %c0_5] : memref<32x1xf32, #tpu.memory_space<vmem>>, vector<32x1xf32>
      %8 = vector.broadcast %7 : vector<32x1xf32> to vector<32x256xf32>
      %9 = arith.addf %6, %8 : vector<32x256xf32>
      %c2_i32_6 = arith.constant 2 : i32
      %10 = tpu.dynamic_rotate %3 by %c2_i32_6 dim 1 : vector<32x256xf32>, i32 -> vector<32x256xf32>
      %c0_7 = arith.constant 0 : index
      %c0_8 = arith.constant 0 : index
      %c0_9 = arith.constant 0 : index
      %11 = vector.load %arg2[%c0_7, %c0_8, %c0_9] : memref<8x32x256xf32, #tpu.memory_space<vmem>>, vector<1x32x256xf32>
      %12 = vector.shape_cast %11 : vector<1x32x256xf32> to vector<32x256xf32>
      %13 = arith.mulf %10, %12 : vector<32x256xf32>
      %14 = arith.addf %9, %13 : vector<32x256xf32>
      %c1_i32_10 = arith.constant 1 : i32
      %15 = tpu.dynamic_rotate %3 by %c1_i32_10 dim 1 : vector<32x256xf32>, i32 -> vector<32x256xf32>
      %c1 = arith.constant 1 : index
      %c0_11 = arith.constant 0 : index
      %c0_12 = arith.constant 0 : index
      %16 = vector.load %arg2[%c1, %c0_11, %c0_12] : memref<8x32x256xf32, #tpu.memory_space<vmem>>, vector<1x32x256xf32>
      %17 = vector.shape_cast %16 : vector<1x32x256xf32> to vector<32x256xf32>
      %18 = arith.mulf %15, %17 : vector<32x256xf32>
      %19 = arith.addf %14, %18 : vector<32x256xf32>
      %c255_i32 = arith.constant 255 : i32
      %20 = tpu.dynamic_rotate %3 by %c255_i32 dim 1 : vector<32x256xf32>, i32 -> vector<32x256xf32>
      %c2 = arith.constant 2 : index
      %c0_13 = arith.constant 0 : index
      %c0_14 = arith.constant 0 : index
      %21 = vector.load %arg2[%c2, %c0_13, %c0_14] : memref<8x32x256xf32, #tpu.memory_space<vmem>>, vector<1x32x256xf32>
      %22 = vector.shape_cast %21 : vector<1x32x256xf32> to vector<32x256xf32>
      %23 = arith.mulf %20, %22 : vector<32x256xf32>
      %24 = arith.addf %19, %23 : vector<32x256xf32>
      %c254_i32 = arith.constant 254 : i32
      %25 = tpu.dynamic_rotate %3 by %c254_i32 dim 1 : vector<32x256xf32>, i32 -> vector<32x256xf32>
      %c3 = arith.constant 3 : index
      %c0_15 = arith.constant 0 : index
      %c0_16 = arith.constant 0 : index
      %26 = vector.load %arg2[%c3, %c0_15, %c0_16] : memref<8x32x256xf32, #tpu.memory_space<vmem>>, vector<1x32x256xf32>
      %27 = vector.shape_cast %26 : vector<1x32x256xf32> to vector<32x256xf32>
      %28 = arith.mulf %25, %27 : vector<32x256xf32>
      %29 = arith.addf %24, %28 : vector<32x256xf32>
      %c32_i32 = arith.constant 32 : i32
      %30 = tpu.dynamic_rotate %3 by %c32_i32 dim 1 : vector<32x256xf32>, i32 -> vector<32x256xf32>
      %c4 = arith.constant 4 : index
      %c0_17 = arith.constant 0 : index
      %c0_18 = arith.constant 0 : index
      %31 = vector.load %arg2[%c4, %c0_17, %c0_18] : memref<8x32x256xf32, #tpu.memory_space<vmem>>, vector<1x32x256xf32>
      %32 = vector.shape_cast %31 : vector<1x32x256xf32> to vector<32x256xf32>
      %33 = arith.mulf %30, %32 : vector<32x256xf32>
      %34 = arith.addf %29, %33 : vector<32x256xf32>
      %c16_i32 = arith.constant 16 : i32
      %35 = tpu.dynamic_rotate %3 by %c16_i32 dim 1 : vector<32x256xf32>, i32 -> vector<32x256xf32>
      %c5 = arith.constant 5 : index
      %c0_19 = arith.constant 0 : index
      %c0_20 = arith.constant 0 : index
      %36 = vector.load %arg2[%c5, %c0_19, %c0_20] : memref<8x32x256xf32, #tpu.memory_space<vmem>>, vector<1x32x256xf32>
      %37 = vector.shape_cast %36 : vector<1x32x256xf32> to vector<32x256xf32>
      %38 = arith.mulf %35, %37 : vector<32x256xf32>
      %39 = arith.addf %34, %38 : vector<32x256xf32>
      %c240_i32 = arith.constant 240 : i32
      %40 = tpu.dynamic_rotate %3 by %c240_i32 dim 1 : vector<32x256xf32>, i32 -> vector<32x256xf32>
      %c6 = arith.constant 6 : index
      %c0_21 = arith.constant 0 : index
      %c0_22 = arith.constant 0 : index
      %41 = vector.load %arg2[%c6, %c0_21, %c0_22] : memref<8x32x256xf32, #tpu.memory_space<vmem>>, vector<1x32x256xf32>
      %42 = vector.shape_cast %41 : vector<1x32x256xf32> to vector<32x256xf32>
      %43 = arith.mulf %40, %42 : vector<32x256xf32>
      %44 = arith.addf %39, %43 : vector<32x256xf32>
      %c224_i32 = arith.constant 224 : i32
      %45 = tpu.dynamic_rotate %3 by %c224_i32 dim 1 : vector<32x256xf32>, i32 -> vector<32x256xf32>
      %c7 = arith.constant 7 : index
      %c0_23 = arith.constant 0 : index
      %c0_24 = arith.constant 0 : index
      %46 = vector.load %arg2[%c7, %c0_23, %c0_24] : memref<8x32x256xf32, #tpu.memory_space<vmem>>, vector<1x32x256xf32>
      %47 = vector.shape_cast %46 : vector<1x32x256xf32> to vector<32x256xf32>
      %48 = arith.mulf %45, %47 : vector<32x256xf32>
      %49 = arith.addf %44, %48 : vector<32x256xf32>
      %cst = arith.constant 0.000000e+00 : f32
      %50 = vector.broadcast %cst : f32 to vector<32x256xf32>
      %51 = arith.maximumf %49, %50 : vector<32x256xf32>
      %cst_25 = arith.constant dense<0.000000e+00> : vector<32xf32>
      %52 = vector.multi_reduction <add>, %51, %cst_25 [1] : vector<32x256xf32> to vector<32xf32>
      %53 = vector.shape_cast %52 : vector<32xf32> to vector<32x1xf32>
      %c0_26 = arith.constant 0 : index
      %c0_27 = arith.constant 0 : index
      %54 = vector.load %arg5[%c0_26, %c0_27] : memref<8x32xf32, #tpu.memory_space<vmem>>, vector<8x32xf32>
      %cst_28 = arith.constant dense<0.000000e+00> : vector<8x1xf32>
      %55 = tpu.matmul %54, %53, %cst_28 {dimension_numbers = #tpu.dot_dimension_numbers<[1], [0], [0], [1], [0, 0, 1, 1], [], []>} : vector<8x32xf32>, vector<32x1xf32>, vector<8x1xf32> -> vector<8x1xf32>
      %cst_29 = arith.constant 0.000000e+00 : f32
      %56 = vector.broadcast %cst_29 : f32 to vector<8x1xf32>
      %57 = arith.maximumf %55, %56 : vector<8x1xf32>
      %c0_30 = arith.constant 0 : index
      %c0_31 = arith.constant 0 : index
      %58 = vector.load %arg6[%c0_30, %c0_31] : memref<32x8xf32, #tpu.memory_space<vmem>>, vector<32x8xf32>
      %cst_32 = arith.constant dense<0.000000e+00> : vector<32x1xf32>
      %59 = tpu.matmul %58, %57, %cst_32 {dimension_numbers = #tpu.dot_dimension_numbers<[1], [0], [0], [1], [0, 0, 1, 1], [], []>} : vector<32x8xf32>, vector<8x1xf32>, vector<32x1xf32> -> vector<32x1xf32>
      %cst_33 = arith.constant 0.000000e+00 : f32
      %60 = vector.broadcast %cst_33 : f32 to vector<32x1xf32>
      %61 = arith.subf %60, %59 : vector<32x1xf32>
      %62 = math.exp %61 : vector<32x1xf32>
      %cst_34 = arith.constant 1.000000e+00 : f32
      %63 = vector.broadcast %cst_34 : f32 to vector<32x1xf32>
      %64 = arith.addf %63, %62 : vector<32x1xf32>
      %cst_35 = arith.constant 1.000000e+00 : f32
      %65 = vector.broadcast %cst_35 : f32 to vector<32x1xf32>
      %66 = arith.divf %65, %64 : vector<32x1xf32>
      %67 = vector.broadcast %66 : vector<32x1xf32> to vector<32x256xf32>
      %68 = arith.mulf %51, %67 : vector<32x256xf32>
      %69 = arith.truncf %68 : vector<32x256xf32> to vector<32x256xbf16>
      %c0_36 = arith.constant 0 : index
      %c0_37 = arith.constant 0 : index
      %70 = vector.load %arg7[%c0_36, %c0_37] : memref<48x32xbf16, #tpu.memory_space<vmem>>, vector<48x32xbf16>
      %cst_38 = arith.constant dense<0.000000e+00> : vector<48x256xf32>
      %71 = tpu.matmul %70, %69, %cst_38 {dimension_numbers = #tpu.dot_dimension_numbers<[1], [0], [0], [1], [0, 0, 1, 1], [], []>} : vector<48x32xbf16>, vector<32x256xbf16>, vector<48x256xf32> -> vector<48x256xf32>
      %c0_39 = arith.constant 0 : index
      %c0_40 = arith.constant 0 : index
      %72 = vector.load %arg8[%c0_39, %c0_40] : memref<48x1xf32, #tpu.memory_space<vmem>>, vector<48x1xf32>
      %73 = vector.broadcast %72 : vector<48x1xf32> to vector<48x256xf32>
      %74 = arith.addf %71, %73 : vector<48x256xf32>
      %cst_41 = arith.constant 0.000000e+00 : f32
      %75 = vector.broadcast %cst_41 : f32 to vector<48x256xf32>
      %76 = arith.maximumf %74, %75 : vector<48x256xf32>
      %77 = arith.index_cast %arg12 : i32 to index
      %c0_42 = arith.constant 0 : index
      %c0_43 = arith.constant 0 : index
      %78 = vector.load %arg10[%77, %c0_42, %c0_43] : memref<2x48x256xf32, #tpu.memory_space<vmem>>, vector<1x48x256xf32>
      %79 = vector.shape_cast %78 : vector<1x48x256xf32> to vector<48x256xf32>
      %80 = vector.shape_cast %76 : vector<48x256xf32> to vector<1x48x256xf32>
      tpu.vector_store %arg10[%77, %c0_42, %c0_43], %80 {strides = array<i32>} : memref<2x48x256xf32, #tpu.memory_space<vmem>>, vector<1x48x256xf32>,
      %c255_i32_44 = arith.constant 255 : i32
      %81 = tpu.dynamic_rotate %76 by %c255_i32_44 dim 1 : vector<48x256xf32>, i32 -> vector<48x256xf32>
      %82 = arith.maximumf %76, %81 : vector<48x256xf32>
      %c240_i32_45 = arith.constant 240 : i32
      %83 = tpu.dynamic_rotate %82 by %c240_i32_45 dim 1 : vector<48x256xf32>, i32 -> vector<48x256xf32>
      %84 = arith.maximumf %82, %83 : vector<48x256xf32>
      %85 = arith.truncf %84 : vector<48x256xf32> to vector<48x256xbf16>
      %c0_46 = arith.constant 0 : index
      %c0_47 = arith.constant 0 : index
      %86 = vector.load %arg9[%c0_46, %c0_47] : memref<256x64xbf16, #tpu.memory_space<vmem>>, vector<256x64xbf16>
      %cst_48 = arith.constant dense<0.000000e+00> : vector<48x64xf32>
      %87 = tpu.matmul %85, %86, %cst_48 {dimension_numbers = #tpu.dot_dimension_numbers<[1], [0], [0], [1], [0, 0, 1, 1], [], []>} : vector<48x256xbf16>, vector<256x64xbf16>, vector<48x64xf32> -> vector<48x64xf32>
      %88 = arith.index_cast %arg12 : i32 to index
      %c0_49 = arith.constant 0 : index
      %c0_50 = arith.constant 0 : index
      %89 = vector.load %arg11[%88, %c0_49, %c0_50] : memref<2x48x64xf32, #tpu.memory_space<vmem>>, vector<1x48x64xf32>
      %90 = vector.shape_cast %89 : vector<1x48x64xf32> to vector<48x64xf32>
      %91 = vector.shape_cast %87 : vector<48x64xf32> to vector<1x48x64xf32>
      tpu.vector_store %arg11[%88, %c0_49, %c0_50], %91 {strides = array<i32>} : memref<2x48x64xf32, #tpu.memory_space<vmem>>, vector<1x48x64xf32>,
    }
    %c2_i32_0 = arith.constant 2 : i32
    return
  }
  func.func @transform_0(%arg0: i32) -> (i32, i32, i32) {
    %c0_i32 = arith.constant 0 : i32
    %c0_i32_0 = arith.constant 0 : i32
    %c0_i32_1 = arith.constant 0 : i32
    return %arg0, %c0_i32, %c0_i32_0 : i32, i32, i32
  }
  func.func @transform_1(%arg0: i32) -> (i32, i32, i32) {
    %c0_i32 = arith.constant 0 : i32
    %c0_i32_0 = arith.constant 0 : i32
    %c0_i32_1 = arith.constant 0 : i32
    %c0_i32_2 = arith.constant 0 : i32
    return %c0_i32, %c0_i32_0, %c0_i32_1 : i32, i32, i32
  }
  func.func @transform_2(%arg0: i32) -> (i32, i32) {
    %c0_i32 = arith.constant 0 : i32
    %c0_i32_0 = arith.constant 0 : i32
    %c0_i32_1 = arith.constant 0 : i32
    return %c0_i32, %c0_i32_0 : i32, i32
  }
  func.func @transform_3(%arg0: i32) -> (i32, i32) {
    %c0_i32 = arith.constant 0 : i32
    %c0_i32_0 = arith.constant 0 : i32
    %c0_i32_1 = arith.constant 0 : i32
    return %c0_i32, %c0_i32_0 : i32, i32
  }
  func.func @transform_4(%arg0: i32) -> (i32, i32) {
    %c0_i32 = arith.constant 0 : i32
    %c0_i32_0 = arith.constant 0 : i32
    %c0_i32_1 = arith.constant 0 : i32
    return %c0_i32, %c0_i32_0 : i32, i32
  }
  func.func @transform_5(%arg0: i32) -> (i32, i32) {
    %c0_i32 = arith.constant 0 : i32
    %c0_i32_0 = arith.constant 0 : i32
    %c0_i32_1 = arith.constant 0 : i32
    return %c0_i32, %c0_i32_0 : i32, i32
  }
  func.func @transform_6(%arg0: i32) -> (i32, i32) {
    %c0_i32 = arith.constant 0 : i32
    %c0_i32_0 = arith.constant 0 : i32
    %c0_i32_1 = arith.constant 0 : i32
    return %c0_i32, %c0_i32_0 : i32, i32
  }
  func.func @transform_7(%arg0: i32) -> (i32, i32) {
    %c0_i32 = arith.constant 0 : i32
    %c0_i32_0 = arith.constant 0 : i32
    %c0_i32_1 = arith.constant 0 : i32
    return %c0_i32, %c0_i32_0 : i32, i32
  }
  func.func @transform_8(%arg0: i32) -> (i32, i32) {
    %c0_i32 = arith.constant 0 : i32
    %c0_i32_0 = arith.constant 0 : i32
    %c0_i32_1 = arith.constant 0 : i32
    return %c0_i32, %c0_i32_0 : i32, i32
  }
  func.func @transform_9(%arg0: i32) -> (i32, i32, i32) {
    %c0_i32 = arith.constant 0 : i32
    %c0_i32_0 = arith.constant 0 : i32
    %c0_i32_1 = arith.constant 0 : i32
    return %arg0, %c0_i32, %c0_i32_0 : i32, i32, i32
  }
  func.func @transform_10(%arg0: i32) -> (i32, i32, i32) {
    %c0_i32 = arith.constant 0 : i32
    %c0_i32_0 = arith.constant 0 : i32
    %c0_i32_1 = arith.constant 0 : i32
    return %arg0, %c0_i32, %c0_i32_0 : i32, i32, i32
  }
}

</mosaic_0001>

<llo_original>
// kernel: tpu_custom_call.1
$region0: #{tpu_custom_call.1}
  #allocation0 [shape = 'u32[]', space=smem, size = 0x4, offset = 0x4, fixed_abs, tag = 'smem constant byte address 0x4 - core index']
  #allocation1 [shape = 'u32[144,128]{1,0:T(1,128)}', space=vmem, size = 0x12000, scoped, tag = 'internal scratch']
  %s0 = inlined_call_operand.hbm [shape: f32[8,32,256], index: 0, kind: input, shape index: {}]
  %s1 = inlined_call_operand.hbm [shape: f32[8,32,256], index: 1, kind: input, shape index: {}]
  %s2 = inlined_call_operand.vmem [shape: f32[32,1], index: 2, kind: input, shape index: {}]
  %s3 = inlined_call_operand.vmem [shape: f32[32,1], index: 3, kind: input, shape index: {}]
  %s4 = inlined_call_operand.vmem [shape: f32[8,32], index: 4, kind: input, shape index: {}]
  %s5 = inlined_call_operand.vmem [shape: f32[32,8], index: 5, kind: input, shape index: {}]
  %s6 = inlined_call_operand.vmem [shape: bf16[48,32], index: 6, kind: input, shape index: {}]
  %s7 = inlined_call_operand.vmem [shape: f32[48,1], index: 7, kind: input, shape index: {}]
  %s8 = inlined_call_operand.vmem [shape: bf16[256,64], index: 8, kind: input, shape index: {}]
  %s9 = inlined_call_operand.hbm [shape: f32[8,48,256], index: 9, kind: output, shape index: {0}]
  %s10 = inlined_call_operand.hbm [shape: f32[8,48,64], index: 10, kind: output, shape index: {1}]
  %11 = xla_tuple %s9, %s10
  %s12 = sld [smem:[#allocation0]]
  $region92: #{tpu_custom_call.1} parent=0
    _
  %s14 = ssub.s32 1, %s12
  %s15 = scalar_select 0, %s14, %s12
  $region1: #{tpu_custom_call.1} parent=0
    #allocation2 [shape = 'u8[131072]{0}', space=vmem, size = 0x20000, scoped, tag = 'input window, operand 0']
    #allocation3 [shape = 's32[2]{0}', space=sflag, size = 0x8, scoped, tag = 'scoped memory for tpu_custom_call.1']
    #allocation4 [shape = 's32[2]{0}', space=sflag, size = 0x8, scoped, tag = 'scoped memory for tpu_custom_call.1']
    #allocation5 [shape = 'u8[262144]{0}', space=vmem, size = 0x40000, scoped, tag = 'input window, operand 1, single buffered']
    #allocation6 [shape = 's32[1]{0}', space=sflag, size = 0x4, scoped, tag = 'scoped memory for tpu_custom_call.1']
    #allocation7 [shape = 'u8[196608]{0}', space=vmem, size = 0x30000, scoped, tag = 'output window, operand 0']
    #allocation8 [shape = 'u8[98304]{0}', space=vmem, size = 0x18000, scoped, tag = 'output window, operand 1']
    #allocation9 [shape = 's32[2]{0}', space=sflag, size = 0x8, scoped, tag = 'scoped memory for tpu_custom_call.1']
    %16 = vsyncpa [#allocation3], 0
    %s17 = scalar_lea.sflag [#allocation3], 1
    %18 = vsyncpa %s17, 0
    %19 = vsyncpa [#allocation6], 0
    %20 = vsyncpa [#allocation4], 0
    %s21 = scalar_lea.sflag [#allocation4], 1
    %22 = vsyncpa %s21, 0
    %23 = vsyncpa [#allocation9], 0
    %s24 = scalar_lea.sflag [#allocation9], 1
    %25 = vsyncpa %s24, 0
    loop: start=0, step=1, limit=6
    $region2: #{tpu_custom_call.1} parent=1 // loop_pre_header
      _
    $region3: #{tpu_custom_call.1} parent=1 // loop_header
      %s27 = sphi 0, %s31
      %p28 = scmp.ge.s32.totalorder %s27, 6
      %s37 = sphi 0, %s39
      %s40 = sphi 0, %s37
      %s41 = sphi 0, %s40
      %s57 = sphi 0, %s41
      %s61 = sphi 0, %s61
      %s63 = sphi 0, %s61
      %s64 = sphi 0, %s63
      %s78 = sphi 0, %s64
      %s82 = sphi 0, %s82
      %s84 = sphi 0, %s82
      %s85 = sphi 0, %s84
      %s99 = sphi 0, %s85
      %s103 = sphi 0, %s103
      %s105 = sphi 0, %s103
      %s106 = sphi 0, %s105
      %s120 = sphi 0, %s106
      %s124 = sphi 0, %s124
      %s126 = sphi 0, %s124
      %s127 = sphi 0, %s126
      %s141 = sphi 0, %s127
      %s145 = sphi 0, %s145
      %s147 = sphi 0, %s145
      %s148 = sphi 0, %s147
      %s162 = sphi 0, %s148
      %s166 = sphi 0, %s166
      %s168 = sphi 0, %s166
      %s169 = sphi 0, %s168
      %s183 = sphi 0, %s169
      %s187 = sphi 0, %s187
      %s189 = sphi 0, %s187
      %s190 = sphi 0, %s189
      %s204 = sphi 0, %s190
      %s208 = sphi 0, %s208
      %s210 = sphi 0, %s208
      %s211 = sphi 0, %s210
      %s225 = sphi 0, %s211
      %s231 = sphi 0, %s233
      %s234 = sphi 0, %s231
      %s235 = sphi 0, %s234
      %s251 = sphi 0, %s235
      %s257 = sphi 0, %s259
      %s260 = sphi 0, %s257
      %s261 = sphi 0, %s260
      %s277 = sphi 0, %s261
    $region4: #{tpu_custom_call.1} parent=1 // loop_header_branch
      %30 = sbr.rel (%p28) target = $region8
    $region5: #{tpu_custom_call.1} parent=1 // loop_body
      %s32 = ssub.s32 %s27, 1
      %s33 = ssub.s32 %s27, 2
      %s34 = sadd.s32 %s27, 1
      %s35 = ssub.s32 %s27, %s34
      %p36 = scmp.eq.s32.totalorder %s35, 0
      %s38 = sadd.s32 %s37, 1
      %s39 = scalar_select %p36, %s37, %s38
      %p42 = pneg %p36
      %p43 = scmp.eq.s32.totalorder %s27, 3
      %p44 = por %p42, %p43
      %p45 = scmp.ne.s32.totalorder %s37, %s40
      %p46 = scmp.eq.s32.totalorder %s27, 0
      %p47 = por %p45, %p46
      %p48 = scmp.ne.s32.totalorder %s37, %s40
      %p49 = scmp.eq.s32.totalorder %s32, 3
      %p50 = por %p48, %p49
      %p51 = scmp.ne.s32.totalorder %s40, %s41
      %p52 = scmp.eq.s32.totalorder %s32, 0
      %p53 = por %p51, %p52
      %p54 = scmp.ne.s32.totalorder %s40, %s41
      %p55 = scmp.eq.s32.totalorder %s33, 3
      %p56 = por %p54, %p55
      %p58 = scmp.ne.s32.totalorder %s41, %s57
      %p59 = scmp.eq.s32.totalorder %s33, 0
      %p60 = por %p58, %p59
      %s62 = sadd.s32 %s61, 1
      %p65 = scmp.eq.s32.totalorder %s27, 3
      %p66 = scmp.ne.s32.totalorder %s61, %s63
      %p67 = scmp.eq.s32.totalorder %s27, 0
      %p68 = por %p66, %p67
      %p69 = scmp.ne.s32.totalorder %s61, %s63
      %p70 = scmp.eq.s32.totalorder %s32, 3
      %p71 = por %p69, %p70
      %p72 = scmp.ne.s32.totalorder %s63, %s64
      %p73 = scmp.eq.s32.totalorder %s32, 0
      %p74 = por %p72, %p73
      %p75 = scmp.ne.s32.totalorder %s63, %s64
      %p76 = scmp.eq.s32.totalorder %s33, 3
      %p77 = por %p75, %p76
      %p79 = scmp.ne.s32.totalorder %s64, %s78
      %p80 = scmp.eq.s32.totalorder %s33, 0
      %p81 = por %p79, %p80
      %s83 = sadd.s32 %s82, 1
      %p86 = scmp.eq.s32.totalorder %s27, 3
      %p87 = scmp.ne.s32.totalorder %s82, %s84
      %p88 = scmp.eq.s32.totalorder %s27, 0
      %p89 = por %p87, %p88
      %p90 = scmp.ne.s32.totalorder %s82, %s84
      %p91 = scmp.eq.s32.totalorder %s32, 3
      %p92 = por %p90, %p91
      %p93 = scmp.ne.s32.totalorder %s84, %s85
      %p94 = scmp.eq.s32.totalorder %s32, 0
      %p95 = por %p93, %p94
      %p96 = scmp.ne.s32.totalorder %s84, %s85
      %p97 = scmp.eq.s32.totalorder %s33, 3
      %p98 = por %p96, %p97
      %p100 = scmp.ne.s32.totalorder %s85, %s99
      %p101 = scmp.eq.s32.totalorder %s33, 0
      %p102 = por %p100, %p101
      %s104 = sadd.s32 %s103, 1
      %p107 = scmp.eq.s32.totalorder %s27, 3
      %p108 = scmp.ne.s32.totalorder %s103, %s105
      %p109 = scmp.eq.s32.totalorder %s27, 0
      %p110 = por %p108, %p109
      %p111 = scmp.ne.s32.totalorder %s103, %s105
      %p112 = scmp.eq.s32.totalorder %s32, 3
      %p113 = por %p111, %p112
      %p114 = scmp.ne.s32.totalorder %s105, %s106
      %p115 = scmp.eq.s32.totalorder %s32, 0
      %p116 = por %p114, %p115
      %p117 = scmp.ne.s32.totalorder %s105, %s106
      %p118 = scmp.eq.s32.totalorder %s33, 3
      %p119 = por %p117, %p118
      %p121 = scmp.ne.s32.totalorder %s106, %s120
      %p122 = scmp.eq.s32.totalorder %s33, 0
      %p123 = por %p121, %p122
      %s125 = sadd.s32 %s124, 1
      %p128 = scmp.eq.s32.totalorder %s27, 3
      %p129 = scmp.ne.s32.totalorder %s124, %s126
      %p130 = scmp.eq.s32.totalorder %s27, 0
      %p131 = por %p129, %p130
      %p132 = scmp.ne.s32.totalorder %s124, %s126
      %p133 = scmp.eq.s32.totalorder %s32, 3
      %p134 = por %p132, %p133
      %p135 = scmp.ne.s32.totalorder %s126, %s127
      %p136 = scmp.eq.s32.totalorder %s32, 0
      %p137 = por %p135, %p136
      %p138 = scmp.ne.s32.totalorder %s126, %s127
      %p139 = scmp.eq.s32.totalorder %s33, 3
      %p140 = por %p138, %p139
      %p142 = scmp.ne.s32.totalorder %s127, %s141
      %p143 = scmp.eq.s32.totalorder %s33, 0
      %p144 = por %p142, %p143
      %s146 = sadd.s32 %s145, 1
      %p149 = scmp.eq.s32.totalorder %s27, 3
      %p150 = scmp.ne.s32.totalorder %s145, %s147
      %p151 = scmp.eq.s32.totalorder %s27, 0
      %p152 = por %p150, %p151
      %p153 = scmp.ne.s32.totalorder %s145, %s147
      %p154 = scmp.eq.s32.totalorder %s32, 3
      %p155 = por %p153, %p154
      %p156 = scmp.ne.s32.totalorder %s147, %s148
      %p157 = scmp.eq.s32.totalorder %s32, 0
      %p158 = por %p156, %p157
      %p159 = scmp.ne.s32.totalorder %s147, %s148
      %p160 = scmp.eq.s32.totalorder %s33, 3
      %p161 = por %p159, %p160
      %p163 = scmp.ne.s32.totalorder %s148, %s162
      %p164 = scmp.eq.s32.totalorder %s33, 0
      %p165 = por %p163, %p164
      %s167 = sadd.s32 %s166, 1
      %p170 = scmp.eq.s32.totalorder %s27, 3
      %p171 = scmp.ne.s32.totalorder %s166, %s168
      %p172 = scmp.eq.s32.totalorder %s27, 0
      %p173 = por %p171, %p172
      %p174 = scmp.ne.s32.totalorder %s166, %s168
      %p175 = scmp.eq.s32.totalorder %s32, 3
      %p176 = por %p174, %p175
      %p177 = scmp.ne.s32.totalorder %s168, %s169
      %p178 = scmp.eq.s32.totalorder %s32, 0
      %p179 = por %p177, %p178
      %p180 = scmp.ne.s32.totalorder %s168, %s169
      %p181 = scmp.eq.s32.totalorder %s33, 3
      %p182 = por %p180, %p181
      %p184 = scmp.ne.s32.totalorder %s169, %s183
      %p185 = scmp.eq.s32.totalorder %s33, 0
      %p186 = por %p184, %p185
      %s188 = sadd.s32 %s187, 1
      %p191 = scmp.eq.s32.totalorder %s27, 3
      %p192 = scmp.ne.s32.totalorder %s187, %s189
      %p193 = scmp.eq.s32.totalorder %s27, 0
      %p194 = por %p192, %p193
      %p195 = scmp.ne.s32.totalorder %s187, %s189
      %p196 = scmp.eq.s32.totalorder %s32, 3
      %p197 = por %p195, %p196
      %p198 = scmp.ne.s32.totalorder %s189, %s190
      %p199 = scmp.eq.s32.totalorder %s32, 0
      %p200 = por %p198, %p199
      %p201 = scmp.ne.s32.totalorder %s189, %s190
      %p202 = scmp.eq.s32.totalorder %s33, 3
      %p203 = por %p201, %p202
      %p205 = scmp.ne.s32.totalorder %s190, %s204
      %p206 = scmp.eq.s32.totalorder %s33, 0
      %p207 = por %p205, %p206
      %s209 = sadd.s32 %s208, 1
      %p212 = scmp.eq.s32.totalorder %s27, 3
      %p213 = scmp.ne.s32.totalorder %s208, %s210
      %p214 = scmp.eq.s32.totalorder %s27, 0
      %p215 = por %p213, %p214
      %p216 = scmp.ne.s32.totalorder %s208, %s210
      %p217 = scmp.eq.s32.totalorder %s32, 3
      %p218 = por %p216, %p217
      %p219 = scmp.ne.s32.totalorder %s210, %s211
      %p220 = scmp.eq.s32.totalorder %s32, 0
      %p221 = por %p219, %p220
      %p222 = scmp.ne.s32.totalorder %s210, %s211
      %p223 = scmp.eq.s32.totalorder %s33, 3
      %p224 = por %p222, %p223
      %p226 = scmp.ne.s32.totalorder %s211, %s225
      %p227 = scmp.eq.s32.totalorder %s33, 0
      %p228 = por %p226, %p227
      %s229 = ssub.s32 %s27, %s34
      %p230 = scmp.eq.s32.totalorder %s229, 0
      %s232 = sadd.s32 %s231, 1
      %s233 = scalar_select %p230, %s231, %s232
      %p236 = pneg %p230
      %p237 = scmp.eq.s32.totalorder %s27, 3
      %p238 = por %p236, %p237
      %p239 = scmp.ne.s32.totalorder %s231, %s234
      %p240 = scmp.eq.s32.totalorder %s27, 0
      %p241 = por %p239, %p240
      %p242 = scmp.ne.s32.totalorder %s231, %s234
      %p243 = scmp.eq.s32.totalorder %s32, 3
      %p244 = por %p242, %p243
      %p245 = scmp.ne.s32.totalorder %s234, %s235
      %p246 = scmp.eq.s32.totalorder %s32, 0
      %p247 = por %p245, %p246
      %p248 = scmp.ne.s32.totalorder %s234, %s235
      %p249 = scmp.eq.s32.totalorder %s33, 3
      %p250 = por %p248, %p249
      %p252 = scmp.ne.s32.totalorder %s235, %s251
      %p253 = scmp.eq.s32.totalorder %s33, 0
      %p254 = por %p252, %p253
      %s255 = ssub.s32 %s27, %s34
      %p256 = scmp.eq.s32.totalorder %s255, 0
      %s258 = sadd.s32 %s257, 1
      %s259 = scalar_select %p256, %s257, %s258
      %p262 = pneg %p256
      %p263 = scmp.eq.s32.totalorder %s27, 3
      %p264 = por %p262, %p263
      %p265 = scmp.ne.s32.totalorder %s257, %s260
      %p266 = scmp.eq.s32.totalorder %s27, 0
      %p267 = por %p265, %p266
      %p268 = scmp.ne.s32.totalorder %s257, %s260
      %p269 = scmp.eq.s32.totalorder %s32, 3
      %p270 = por %p268, %p269
      %p271 = scmp.ne.s32.totalorder %s260, %s261
      %p272 = scmp.eq.s32.totalorder %s32, 0
      %p273 = por %p271, %p272
      %p274 = scmp.ne.s32.totalorder %s260, %s261
      %p275 = scmp.eq.s32.totalorder %s33, 3
      %p276 = por %p274, %p275
      %p278 = scmp.ne.s32.totalorder %s261, %s277
      %p279 = scmp.eq.s32.totalorder %s33, 0
      %p280 = por %p278, %p279
      %p281 = scmp.le.s32.totalorder 1, %s27
      %p282 = scmp.lt.s32.totalorder %s27, 5
      %p283 = pnand %p281, %p282
      %p284 = pneg %p283
      // Predicated region
      $region9: #{tpu_custom_call.1} parent=5 // pred_check
        _
      $region10: #{tpu_custom_call.1} parent=5 // pred_check_branch
        %286 = sbr.rel (%p283) target = $region12
      $region11: #{tpu_custom_call.1} parent=5 // pred_region
        %s287 = ssub.s32 %s27, 1
        // Predicated region
        $region13: #{tpu_custom_call.1} parent=11 // pred_check
          %p288 = pneg %p74
        $region14: #{tpu_custom_call.1} parent=11 // pred_check_branch
          %290 = sbr.rel (%p288) target = $region16
        $region15: #{tpu_custom_call.1} parent=11 // pred_region
          %s292 = ssub.s32 8192, 8192
          %293 = vsyncadd [#allocation6], %s292
          %s294 = sshll.u32 [#allocation5], 4
          %s295 = int_to_ptr.vmem [resolvable:$true] %s294
          %300 = dma.hbm_to_vmem [thread:$0]  %s1, 8192, %s295, [#allocation6], 256, 256, 16
        $region16: #{tpu_custom_call.1} parent=11 // pred_fallthru
          _
        // Predicated region
        $region17: #{tpu_custom_call.1} parent=11 // pred_check
          %p301 = pneg %p95
        $region18: #{tpu_custom_call.1} parent=11 // pred_check_branch
          %303 = sbr.rel (%p301) target = $region20
        $region19: #{tpu_custom_call.1} parent=11 // pred_region
          _
        $region20: #{tpu_custom_call.1} parent=11 // pred_fallthru
          _
        // Predicated region
        $region21: #{tpu_custom_call.1} parent=11 // pred_check
          %p304 = pneg %p116
        $region22: #{tpu_custom_call.1} parent=11 // pred_check_branch
          %306 = sbr.rel (%p304) target = $region24
        $region23: #{tpu_custom_call.1} parent=11 // pred_region
          _
        $region24: #{tpu_custom_call.1} parent=11 // pred_fallthru
          _
        // Predicated region
        $region25: #{tpu_custom_call.1} parent=11 // pred_check
          %p307 = pneg %p137
        $region26: #{tpu_custom_call.1} parent=11 // pred_check_branch
          %309 = sbr.rel (%p307) target = $region28
        $region27: #{tpu_custom_call.1} parent=11 // pred_region
          _
        $region28: #{tpu_custom_call.1} parent=11 // pred_fallthru
          _
        // Predicated region
        $region29: #{tpu_custom_call.1} parent=11 // pred_check
          %p310 = pneg %p158
        $region30: #{tpu_custom_call.1} parent=11 // pred_check_branch
          %312 = sbr.rel (%p310) target = $region32
        $region31: #{tpu_custom_call.1} parent=11 // pred_region
          _
        $region32: #{tpu_custom_call.1} parent=11 // pred_fallthru
          _
        // Predicated region
        $region33: #{tpu_custom_call.1} parent=11 // pred_check
          %p313 = pneg %p179
        $region34: #{tpu_custom_call.1} parent=11 // pred_check_branch
          %315 = sbr.rel (%p313) target = $region36
        $region35: #{tpu_custom_call.1} parent=11 // pred_region
          _
        $region36: #{tpu_custom_call.1} parent=11 // pred_fallthru
          _
        // Predicated region
        $region37: #{tpu_custom_call.1} parent=11 // pred_check
          %p316 = pneg %p200
        $region38: #{tpu_custom_call.1} parent=11 // pred_check_branch
          %318 = sbr.rel (%p316) target = $region40
        $region39: #{tpu_custom_call.1} parent=11 // pred_region
          _
        $region40: #{tpu_custom_call.1} parent=11 // pred_fallthru
          _
        // Predicated region
        $region41: #{tpu_custom_call.1} parent=11 // pred_check
          %p319 = pneg %p221
        $region42: #{tpu_custom_call.1} parent=11 // pred_check_branch
          %321 = sbr.rel (%p319) target = $region44
        $region43: #{tpu_custom_call.1} parent=11 // pred_region
          _
        $region44: #{tpu_custom_call.1} parent=11 // pred_fallthru
          _
      $region12: #{tpu_custom_call.1} parent=5 // pred_fallthru
        _
      %p322 = scmp.lt.s32.totalorder %s27, 4
      // Predicated region
      $region45: #{tpu_custom_call.1} parent=5 // pred_check
        %p323 = pneg %p322
      $region46: #{tpu_custom_call.1} parent=5 // pred_check_branch
        %325 = sbr.rel (%p323) target = $region48
      $region47: #{tpu_custom_call.1} parent=5 // pred_region
        // Predicated region
        $region49: #{tpu_custom_call.1} parent=47 // pred_check
          %p326 = pneg %p47
        $region50: #{tpu_custom_call.1} parent=47 // pred_check_branch
          %328 = sbr.rel (%p326) target = $region52
        $region51: #{tpu_custom_call.1} parent=47 // pred_region
          %s329 = sand.u32 %s37, 1
          %s330 = scalar_lea.sflag [#allocation3], %s329
          %s331 = sand.u32 %s37, 1
          %s332 = smul.addr %s331, 128
          %s333 = scalar_lea.vmem [#allocation2], %s332
          %s334 = smul.u32 2, %s27
          %s336 = ssub.s32 2048, 2048
          %337 = vsyncadd %s330, %s336
          %s338 = smul.addr %s334, 8
          %s339 = smul.addr %s338, 128
          %s340 = scalar_lea.hbm %s0, %s339
          %s341 = sshll.u32 %s333, 4
          %s342 = int_to_ptr.vmem [resolvable:$true] %s341
          %347 = dma.hbm_to_vmem [thread:$0]  %s340, 2048, %s342, %s330, 256, 256, 16
        $region52: #{tpu_custom_call.1} parent=47 // pred_fallthru
          _
      $region48: #{tpu_custom_call.1} parent=5 // pred_fallthru
        _
      %p348 = scmp.le.s32.totalorder 1, %s27
      %p349 = scmp.lt.s32.totalorder %s27, 5
      %p350 = pnand %p348, %p349
      %p351 = pneg %p350
      // Predicated region
      $region53: #{tpu_custom_call.1} parent=5 // pred_check
        _
      $region54: #{tpu_custom_call.1} parent=5 // pred_check_branch
        %353 = sbr.rel (%p350) target = $region56
      $region55: #{tpu_custom_call.1} parent=5 // pred_region
        %s354 = ssub.s32 %s27, 1
        %s355 = sand.u32 %s40, 1
        %s356 = scalar_lea.sflag [#allocation3], %s355
        %s357 = sand.u32 %s40, 1
        %s358 = smul.addr %s357, 128
        %s359 = scalar_lea.vmem [#allocation2], %s358
        // Predicated region
        $region57: #{tpu_custom_call.1} parent=55 // pred_check
          %p360 = pneg %p53
        $region58: #{tpu_custom_call.1} parent=55 // pred_check_branch
          %362 = sbr.rel (%p360) target = $region60
        $region59: #{tpu_custom_call.1} parent=55 // pred_region
          %363 = dma.done %s356, 2048
        $region60: #{tpu_custom_call.1} parent=55 // pred_fallthru
          _
        // Predicated region
        $region61: #{tpu_custom_call.1} parent=55 // pred_check
          %p364 = pneg %p74
        $region62: #{tpu_custom_call.1} parent=55 // pred_check_branch
          %366 = sbr.rel (%p364) target = $region64
        $region63: #{tpu_custom_call.1} parent=55 // pred_region
          %367 = dma.done [#allocation6], 8192
        $region64: #{tpu_custom_call.1} parent=55 // pred_fallthru
          _
        %s368 = sand.u32 %s40, 1
        %s369 = scalar_lea.sflag [#allocation3], %s368
        %s370 = sand.u32 %s40, 1
        %s371 = smul.addr %s370, 128
        %s372 = scalar_lea.vmem [#allocation2], %s371
        %p373 = pneg %p53
        %p374 = pneg %p50
        %p375 = pneg %p74
        %p376 = pneg %p71
        %p377 = pneg %p95
        %p378 = pneg %p92
        %p379 = pneg %p116
        %p380 = pneg %p113
        %p381 = pneg %p137
        %p382 = pneg %p134
        %p383 = pneg %p158
        %p384 = pneg %p155
        %p385 = pneg %p179
        %p386 = pneg %p176
        %p387 = pneg %p200
        %p388 = pneg %p197
        %p389 = pneg %p221
        %p390 = pneg %p218
        %p391 = pneg %p247
        %p392 = pneg %p244
        %s393 = sand.u32 %s234, 1
        %s394 = scalar_lea.sflag [#allocation4], %s393
        %s395 = sand.u32 %s234, 1
        %s396 = smul.addr %s395, 192
        %s397 = scalar_lea.vmem [#allocation7], %s396
        %p398 = pneg %p273
        %p399 = pneg %p270
        %s400 = sand.u32 %s260, 1
        %s401 = scalar_lea.sflag [#allocation9], %s400
        %s402 = sand.u32 %s260, 1
        %s403 = smul.addr %s402, 96
        %s404 = scalar_lea.vmem [#allocation8], %s403
        %s405 = smul.u32 2, %s32
        %s406 = smul.u32 2, %s32
        %s407 = smul.u32 2, %s32
        loop: start=0, step=1, limit=2
        $region65: #{tpu_custom_call.1} parent=55 // loop_pre_header
          _
        $region66: #{tpu_custom_call.1} parent=55 // loop_header
          %s410 = sphi 0, %s414
          %p411 = scmp.ge.s32.totalorder %s410, 2
        $region67: #{tpu_custom_call.1} parent=55 // loop_header_branch
          %413 = sbr.rel (%p411) target = $region71
        $region68: #{tpu_custom_call.1} parent=55 // loop_body
          %s415 = smul.u32 %s410, 8
          %s416 = smul.addr %s415, 8
          %s417 = scalar_lea.vmem %s359, %s416 [#allocation2]
          %v418 = vld [vmem:[%s417] sm:$0xff]
          %v419 = vld [vmem:[%s417 + $0x8] sm:$0xff]
          %v420 = vld [vmem:[%s417 + $0x10] sm:$0xff]
          %v421 = vld [vmem:[%s417 + $0x18] sm:$0xff]
          %v422 = vld [vmem:[%s417 + $0x20] sm:$0xff]
          %v423 = vld [vmem:[%s417 + $0x28] sm:$0xff]
          %v424 = vld [vmem:[%s417 + $0x30] sm:$0xff]
          %v425 = vld [vmem:[%s417 + $0x38] sm:$0xff]
          %v426 = vld [vmem:[%s2] sm:$0xff]
          %v427 = vld [vmem:[%s2 + $0x8] sm:$0xff]
          %v428 = vld [vmem:[%s2 + $0x10] sm:$0xff]
          %v429 = vld [vmem:[%s2 + $0x18] sm:$0xff]
          %431 = vset.pattern.permute.xlu0 0
          %432 = vperm.xlu0 %431, %v426
          %v433 = vpop.permute.xlu0 %432
          %436 = vset.pattern.permute.xlu0 0
          %437 = vperm.xlu0 %436, %v427
          %v438 = vpop.permute.xlu0 %437
          %441 = vset.pattern.permute.xlu0 0
          %442 = vperm.xlu0 %441, %v428
          %v443 = vpop.permute.xlu0 %442
          %446 = vset.pattern.permute.xlu0 0
          %447 = vperm.xlu0 %446, %v429
          %v448 = vpop.permute.xlu0 %447
          %v450 = vmul.f32 %v418, %v433
          %v451 = vmul.f32 %v419, %v433
          %v452 = vmul.f32 %v420, %v438
          %v453 = vmul.f32 %v421, %v438
          %v454 = vmul.f32 %v422, %v443
          %v455 = vmul.f32 %v423, %v443
          %v456 = vmul.f32 %v424, %v448
          %v457 = vmul.f32 %v425, %v448
          %v458 = vld [vmem:[%s3] sm:$0xff]
          %v459 = vld [vmem:[%s3 + $0x8] sm:$0xff]
          %v460 = vld [vmem:[%s3 + $0x10] sm:$0xff]
          %v461 = vld [vmem:[%s3 + $0x18] sm:$0xff]
          %463 = vset.pattern.permute.xlu0 0
          %464 = vperm.xlu0 %463, %v458
          %v465 = vpop.permute.xlu0 %464
          %468 = vset.pattern.permute.xlu0 0
          %469 = vperm.xlu0 %468, %v459
          %v470 = vpop.permute.xlu0 %469
          %473 = vset.pattern.permute.xlu0 0
          %474 = vperm.xlu0 %473, %v460
          %v475 = vpop.permute.xlu0 %474
          %478 = vset.pattern.permute.xlu0 0
          %479 = vperm.xlu0 %478, %v461
          %v480 = vpop.permute.xlu0 %479
          %v482 = vadd.f32 %v450, %v465
          %v483 = vadd.f32 %v451, %v465
          %v484 = vadd.f32 %v452, %v470
          %v485 = vadd.f32 %v453, %v470
          %v486 = vadd.f32 %v454, %v475
          %v487 = vadd.f32 %v455, %v475
          %v488 = vadd.f32 %v456, %v480
          %v489 = vadd.f32 %v457, %v480
          %490 = vrot.lane.b32.xlu0 %v418, 2
          %v491 = vpop.permute.xlu0 %490
          %492 = vrot.lane.b32.xlu0 %v420, 2
          %v493 = vpop.permute.xlu0 %492
          %494 = vrot.lane.b32.xlu0 %v422, 2
          %v495 = vpop.permute.xlu0 %494
          %496 = vrot.lane.b32.xlu0 %v424, 2
          %v497 = vpop.permute.xlu0 %496
          %498 = vrot.lane.b32.xlu0 %v419, 2
          %v499 = vpop.permute.xlu0 %498
          %500 = vrot.lane.b32.xlu0 %v421, 2
          %v501 = vpop.permute.xlu0 %500
          %502 = vrot.lane.b32.xlu0 %v423, 2
          %v503 = vpop.permute.xlu0 %502
          %504 = vrot.lane.b32.xlu0 %v425, 2
          %v505 = vpop.permute.xlu0 %504
          %v506 = vlaneseq
          %v507 = vand.u32 %v506, 127
          %vm508 = vcmp.lt.s32.totalorder %v507, 2
          %v509 = vsel %vm508, %v491, %v499
          %v510 = vsel %vm508, %v493, %v501
          %v511 = vsel %vm508, %v495, %v503
          %v512 = vsel %vm508, %v497, %v505
          %v513 = vsel %vm508, %v499, %v491
          %v514 = vsel %vm508, %v501, %v493
          %v515 = vsel %vm508, %v503, %v495
          %v516 = vsel %vm508, %v505, %v497
          %v517 = vld [vmem:[#allocation5] sm:$0xff]
          %v518 = vld [vmem:[#allocation5 + $0x8] sm:$0xff]
          %v519 = vld [vmem:[#allocation5 + $0x10] sm:$0xff]
          %v520 = vld [vmem:[#allocation5 + $0x18] sm:$0xff]
          %v521 = vld [vmem:[#allocation5 + $0x20] sm:$0xff]
          %v522 = vld [vmem:[#allocation5 + $0x28] sm:$0xff]
          %v523 = vld [vmem:[#allocation5 + $0x30] sm:$0xff]
          %v524 = vld [vmem:[#allocation5 + $0x38] sm:$0xff]
          %v525 = vmul.f32 %v513, %v517
          %v526 = vmul.f32 %v509, %v518
          %v527 = vmul.f32 %v514, %v519
          %v528 = vmul.f32 %v510, %v520
          %v529 = vmul.f32 %v515, %v521
          %v530 = vmul.f32 %v511, %v522
          %v531 = vmul.f32 %v516, %v523
          %v532 = vmul.f32 %v512, %v524
          %v533 = vadd.f32 %v482, %v525
          %v534 = vadd.f32 %v483, %v526
          %v535 = vadd.f32 %v484, %v527
          %v536 = vadd.f32 %v485, %v528
          %v537 = vadd.f32 %v486, %v529
          %v538 = vadd.f32 %v487, %v530
          %v539 = vadd.f32 %v488, %v531
          %v540 = vadd.f32 %v489, %v532
          %541 = vrot.lane.b32.xlu0 %v418, 1
          %v542 = vpop.permute.xlu0 %541
          %543 = vrot.lane.b32.xlu0 %v420, 1
          %v544 = vpop.permute.xlu0 %543
          %545 = vrot.lane.b32.xlu0 %v422, 1
          %v546 = vpop.permute.xlu0 %545
          %547 = vrot.lane.b32.xlu0 %v424, 1
          %v548 = vpop.permute.xlu0 %547
          %549 = vrot.lane.b32.xlu0 %v419, 1
          %v550 = vpop.permute.xlu0 %549
          %551 = vrot.lane.b32.xlu0 %v421, 1
          %v552 = vpop.permute.xlu0 %551
          %553 = vrot.lane.b32.xlu0 %v423, 1
          %v554 = vpop.permute.xlu0 %553
          %555 = vrot.lane.b32.xlu0 %v425, 1
          %v556 = vpop.permute.xlu0 %555
          %vm557 = vcmp.lt.s32.totalorder %v507, 1
          %v558 = vsel %vm557, %v542, %v550
          %v559 = vsel %vm557, %v544, %v552
          %v560 = vsel %vm557, %v546, %v554
          %v561 = vsel %vm557, %v548, %v556
          %v562 = vsel %vm557, %v550, %v542
          %v563 = vsel %vm557, %v552, %v544
          %v564 = vsel %vm557, %v554, %v546
          %v565 = vsel %vm557, %v556, %v548
          %s566 = scalar_lea.vmem [#allocation5], 64
          %v567 = vld [vmem:[%s566] sm:$0xff]
          %v568 = vld [vmem:[%s566 + $0x8] sm:$0xff]
          %v569 = vld [vmem:[%s566 + $0x10] sm:$0xff]
          %v570 = vld [vmem:[%s566 + $0x18] sm:$0xff]
          %v571 = vld [vmem:[%s566 + $0x20] sm:$0xff]
          %v572 = vld [vmem:[%s566 + $0x28] sm:$0xff]
          %v573 = vld [vmem:[%s566 + $0x30] sm:$0xff]
          %v574 = vld [vmem:[%s566 + $0x38] sm:$0xff]
          %v575 = vmul.f32 %v562, %v567
          %v576 = vmul.f32 %v558, %v568
          %v577 = vmul.f32 %v563, %v569
          %v578 = vmul.f32 %v559, %v570
          %v579 = vmul.f32 %v564, %v571
          %v580 = vmul.f32 %v560, %v572
          %v581 = vmul.f32 %v565, %v573
          %v582 = vmul.f32 %v561, %v574
          %v583 = vadd.f32 %v533, %v575
          %v584 = vadd.f32 %v534, %v576
          %v585 = vadd.f32 %v535, %v577
          %v586 = vadd.f32 %v536, %v578
          %v587 = vadd.f32 %v537, %v579
          %v588 = vadd.f32 %v538, %v580
          %v589 = vadd.f32 %v539, %v581
          %v590 = vadd.f32 %v540, %v582
          %591 = vrot.lane.b32.xlu0 %v418, 127
          %v592 = vpop.permute.xlu0 %591
          %593 = vrot.lane.b32.xlu0 %v420, 127
          %v594 = vpop.permute.xlu0 %593
          %595 = vrot.lane.b32.xlu0 %v422, 127
          %v596 = vpop.permute.xlu0 %595
          %597 = vrot.lane.b32.xlu0 %v424, 127
          %v598 = vpop.permute.xlu0 %597
          %599 = vrot.lane.b32.xlu0 %v419, 127
          %v600 = vpop.permute.xlu0 %599
          %601 = vrot.lane.b32.xlu0 %v421, 127
          %v602 = vpop.permute.xlu0 %601
          %603 = vrot.lane.b32.xlu0 %v423, 127
          %v604 = vpop.permute.xlu0 %603
          %605 = vrot.lane.b32.xlu0 %v425, 127
          %v606 = vpop.permute.xlu0 %605
          %vm607 = vcmp.lt.s32.totalorder %v507, 127
          %v608 = vsel %vm607, %v592, %v600
          %v609 = vsel %vm607, %v594, %v602
          %v610 = vsel %vm607, %v596, %v604
          %v611 = vsel %vm607, %v598, %v606
          %v612 = vsel %vm607, %v600, %v592
          %v613 = vsel %vm607, %v602, %v594
          %v614 = vsel %vm607, %v604, %v596
          %v615 = vsel %vm607, %v606, %v598
          %s616 = scalar_lea.vmem [#allocation5], 128
          %v617 = vld [vmem:[%s616] sm:$0xff]
          %v618 = vld [vmem:[%s616 + $0x8] sm:$0xff]
          %v619 = vld [vmem:[%s616 + $0x10] sm:$0xff]
          %v620 = vld [vmem:[%s616 + $0x18] sm:$0xff]
          %v621 = vld [vmem:[%s616 + $0x20] sm:$0xff]
          %v622 = vld [vmem:[%s616 + $0x28] sm:$0xff]
          %v623 = vld [vmem:[%s616 + $0x30] sm:$0xff]
          %v624 = vld [vmem:[%s616 + $0x38] sm:$0xff]
          %v625 = vmul.f32 %v608, %v617
          %v626 = vmul.f32 %v612, %v618
          %v627 = vmul.f32 %v609, %v619
          %v628 = vmul.f32 %v613, %v620
          %v629 = vmul.f32 %v610, %v621
          %v630 = vmul.f32 %v614, %v622
          %v631 = vmul.f32 %v611, %v623
          %v632 = vmul.f32 %v615, %v624
          %v633 = vadd.f32 %v583, %v625
          %v634 = vadd.f32 %v584, %v626
          %v635 = vadd.f32 %v585, %v627
          %v636 = vadd.f32 %v586, %v628
          %v637 = vadd.f32 %v587, %v629
          %v638 = vadd.f32 %v588, %v630
          %v639 = vadd.f32 %v589, %v631
          %v640 = vadd.f32 %v590, %v632
          %641 = vrot.lane.b32.xlu0 %v418, 126
          %v642 = vpop.permute.xlu0 %641
          %643 = vrot.lane.b32.xlu0 %v420, 126
          %v644 = vpop.permute.xlu0 %643
          %645 = vrot.lane.b32.xlu0 %v422, 126
          %v646 = vpop.permute.xlu0 %645
          %647 = vrot.lane.b32.xlu0 %v424, 126
          %v648 = vpop.permute.xlu0 %647
          %649 = vrot.lane.b32.xlu0 %v419, 126
          %v650 = vpop.permute.xlu0 %649
          %651 = vrot.lane.b32.xlu0 %v421, 126
          %v652 = vpop.permute.xlu0 %651
          %653 = vrot.lane.b32.xlu0 %v423, 126
          %v654 = vpop.permute.xlu0 %653
          %655 = vrot.lane.b32.xlu0 %v425, 126
          %v656 = vpop.permute.xlu0 %655
          %vm657 = vcmp.lt.s32.totalorder %v507, 126
          %v658 = vsel %vm657, %v642, %v650
          %v659 = vsel %vm657, %v644, %v652
          %v660 = vsel %vm657, %v646, %v654
          %v661 = vsel %vm657, %v648, %v656
          %v662 = vsel %vm657, %v650, %v642
          %v663 = vsel %vm657, %v652, %v644
          %v664 = vsel %vm657, %v654, %v646
          %v665 = vsel %vm657, %v656, %v648
          %s666 = scalar_lea.vmem [#allocation5], 192
          %v667 = vld [vmem:[%s666] sm:$0xff]
          %v668 = vld [vmem:[%s666 + $0x8] sm:$0xff]
          %v669 = vld [vmem:[%s666 + $0x10] sm:$0xff]
          %v670 = vld [vmem:[%s666 + $0x18] sm:$0xff]
          %v671 = vld [vmem:[%s666 + $0x20] sm:$0xff]
          %v672 = vld [vmem:[%s666 + $0x28] sm:$0xff]
          %v673 = vld [vmem:[%s666 + $0x30] sm:$0xff]
          %v674 = vld [vmem:[%s666 + $0x38] sm:$0xff]
          %v675 = vmul.f32 %v658, %v667
          %v676 = vmul.f32 %v662, %v668
          %v677 = vmul.f32 %v659, %v669
          %v678 = vmul.f32 %v663, %v670
          %v679 = vmul.f32 %v660, %v671
          %v680 = vmul.f32 %v664, %v672
          %v681 = vmul.f32 %v661, %v673
          %v682 = vmul.f32 %v665, %v674
          %v683 = vadd.f32 %v633, %v675
          %v684 = vadd.f32 %v634, %v676
          %v685 = vadd.f32 %v635, %v677
          %v686 = vadd.f32 %v636, %v678
          %v687 = vadd.f32 %v637, %v679
          %v688 = vadd.f32 %v638, %v680
          %v689 = vadd.f32 %v639, %v681
          %v690 = vadd.f32 %v640, %v682
          %691 = vrot.lane.b32.xlu0 %v418, 32
          %v692 = vpop.permute.xlu0 %691
          %693 = vrot.lane.b32.xlu0 %v420, 32
          %v694 = vpop.permute.xlu0 %693
          %695 = vrot.lane.b32.xlu0 %v422, 32
          %v696 = vpop.permute.xlu0 %695
          %697 = vrot.lane.b32.xlu0 %v424, 32
          %v698 = vpop.permute.xlu0 %697
          %699 = vrot.lane.b32.xlu0 %v419, 32
          %v700 = vpop.permute.xlu0 %699
          %701 = vrot.lane.b32.xlu0 %v421, 32
          %v702 = vpop.permute.xlu0 %701
          %703 = vrot.lane.b32.xlu0 %v423, 32
          %v704 = vpop.permute.xlu0 %703
          %705 = vrot.lane.b32.xlu0 %v425, 32
          %v706 = vpop.permute.xlu0 %705
          %vm707 = vcmp.lt.s32.totalorder %v507, 32
          %v708 = vsel %vm707, %v692, %v700
          %v709 = vsel %vm707, %v694, %v702
          %v710 = vsel %vm707, %v696, %v704
          %v711 = vsel %vm707, %v698, %v706
          %v712 = vsel %vm707, %v700, %v692
          %v713 = vsel %vm707, %v702, %v694
          %v714 = vsel %vm707, %v704, %v696
          %v715 = vsel %vm707, %v706, %v698
          %s716 = scalar_lea.vmem [#allocation5], 256
          %v717 = vld [vmem:[%s716] sm:$0xff]
          %v718 = vld [vmem:[%s716 + $0x8] sm:$0xff]
          %v719 = vld [vmem:[%s716 + $0x10] sm:$0xff]
          %v720 = vld [vmem:[%s716 + $0x18] sm:$0xff]
          %v721 = vld [vmem:[%s716 + $0x20] sm:$0xff]
          %v722 = vld [vmem:[%s716 + $0x28] sm:$0xff]
          %v723 = vld [vmem:[%s716 + $0x30] sm:$0xff]
          %v724 = vld [vmem:[%s716 + $0x38] sm:$0xff]
          %v725 = vmul.f32 %v712, %v717
          %v726 = vmul.f32 %v708, %v718
          %v727 = vmul.f32 %v713, %v719
          %v728 = vmul.f32 %v709, %v720
          %v729 = vmul.f32 %v714, %v721
          %v730 = vmul.f32 %v710, %v722
          %v731 = vmul.f32 %v715, %v723
          %v732 = vmul.f32 %v711, %v724
          %v733 = vadd.f32 %v683, %v725
          %v734 = vadd.f32 %v684, %v726
          %v735 = vadd.f32 %v685, %v727
          %v736 = vadd.f32 %v686, %v728
          %v737 = vadd.f32 %v687, %v729
          %v738 = vadd.f32 %v688, %v730
          %v739 = vadd.f32 %v689, %v731
          %v740 = vadd.f32 %v690, %v732
          %741 = vrot.lane.b32.xlu0 %v418, 16
          %v742 = vpop.permute.xlu0 %741
          %743 = vrot.lane.b32.xlu0 %v420, 16
          %v744 = vpop.permute.xlu0 %743
          %745 = vrot.lane.b32.xlu0 %v422, 16
          %v746 = vpop.permute.xlu0 %745
          %747 = vrot.lane.b32.xlu0 %v424, 16
          %v748 = vpop.permute.xlu0 %747
          %749 = vrot.lane.b32.xlu0 %v419, 16
          %v750 = vpop.permute.xlu0 %749
          %751 = vrot.lane.b32.xlu0 %v421, 16
          %v752 = vpop.permute.xlu0 %751
          %753 = vrot.lane.b32.xlu0 %v423, 16
          %v754 = vpop.permute.xlu0 %753
          %755 = vrot.lane.b32.xlu0 %v425, 16
          %v756 = vpop.permute.xlu0 %755
          %vm757 = vcmp.lt.s32.totalorder %v507, 16
          %v758 = vsel %vm757, %v742, %v750
          %v759 = vsel %vm757, %v744, %v752
          %v760 = vsel %vm757, %v746, %v754
          %v761 = vsel %vm757, %v748, %v756
          %v762 = vsel %vm757, %v750, %v742
          %v763 = vsel %vm757, %v752, %v744
          %v764 = vsel %vm757, %v754, %v746
          %v765 = vsel %vm757, %v756, %v748
          %s766 = scalar_lea.vmem [#allocation5], 320
          %v767 = vld [vmem:[%s766] sm:$0xff]
          %v768 = vld [vmem:[%s766 + $0x8] sm:$0xff]
          %v769 = vld [vmem:[%s766 + $0x10] sm:$0xff]
          %v770 = vld [vmem:[%s766 + $0x18] sm:$0xff]
          %v771 = vld [vmem:[%s766 + $0x20] sm:$0xff]
          %v772 = vld [vmem:[%s766 + $0x28] sm:$0xff]
          %v773 = vld [vmem:[%s766 + $0x30] sm:$0xff]
          %v774 = vld [vmem:[%s766 + $0x38] sm:$0xff]
          %v775 = vmul.f32 %v762, %v767
          %v776 = vmul.f32 %v758, %v768
          %v777 = vmul.f32 %v763, %v769
          %v778 = vmul.f32 %v759, %v770
          %v779 = vmul.f32 %v764, %v771
          %v780 = vmul.f32 %v760, %v772
          %v781 = vmul.f32 %v765, %v773
          %v782 = vmul.f32 %v761, %v774
          %v783 = vadd.f32 %v733, %v775
          %v784 = vadd.f32 %v734, %v776
          %v785 = vadd.f32 %v735, %v777
          %v786 = vadd.f32 %v736, %v778
          %v787 = vadd.f32 %v737, %v779
          %v788 = vadd.f32 %v738, %v780
          %v789 = vadd.f32 %v739, %v781
          %v790 = vadd.f32 %v740, %v782
          %791 = vrot.lane.b32.xlu0 %v418, 112
          %v792 = vpop.permute.xlu0 %791
          %793 = vrot.lane.b32.xlu0 %v420, 112
          %v794 = vpop.permute.xlu0 %793
          %795 = vrot.lane.b32.xlu0 %v422, 112
          %v796 = vpop.permute.xlu0 %795
          %797 = vrot.lane.b32.xlu0 %v424, 112
          %v798 = vpop.permute.xlu0 %797
          %799 = vrot.lane.b32.xlu0 %v419, 112
          %v800 = vpop.permute.xlu0 %799
          %801 = vrot.lane.b32.xlu0 %v421, 112
          %v802 = vpop.permute.xlu0 %801
          %803 = vrot.lane.b32.xlu0 %v423, 112
          %v804 = vpop.permute.xlu0 %803
          %805 = vrot.lane.b32.xlu0 %v425, 112
          %v806 = vpop.permute.xlu0 %805
          %vm807 = vcmp.lt.s32.totalorder %v507, 112
          %v808 = vsel %vm807, %v792, %v800
          %v809 = vsel %vm807, %v794, %v802
          %v810 = vsel %vm807, %v796, %v804
          %v811 = vsel %vm807, %v798, %v806
          %v812 = vsel %vm807, %v800, %v792
          %v813 = vsel %vm807, %v802, %v794
          %v814 = vsel %vm807, %v804, %v796
          %v815 = vsel %vm807, %v806, %v798
          %s816 = scalar_lea.vmem [#allocation5], 384
          %v817 = vld [vmem:[%s816] sm:$0xff]
          %v818 = vld [vmem:[%s816 + $0x8] sm:$0xff]
          %v819 = vld [vmem:[%s816 + $0x10] sm:$0xff]
          %v820 = vld [vmem:[%s816 + $0x18] sm:$0xff]
          %v821 = vld [vmem:[%s816 + $0x20] sm:$0xff]
          %v822 = vld [vmem:[%s816 + $0x28] sm:$0xff]
          %v823 = vld [vmem:[%s816 + $0x30] sm:$0xff]
          %v824 = vld [vmem:[%s816 + $0x38] sm:$0xff]
          %v825 = vmul.f32 %v808, %v817
          %v826 = vmul.f32 %v812, %v818
          %v827 = vmul.f32 %v809, %v819
          %v828 = vmul.f32 %v813, %v820
          %v829 = vmul.f32 %v810, %v821
          %v830 = vmul.f32 %v814, %v822
          %v831 = vmul.f32 %v811, %v823
          %v832 = vmul.f32 %v815, %v824
          %v833 = vadd.f32 %v783, %v825
          %v834 = vadd.f32 %v784, %v826
          %v835 = vadd.f32 %v785, %v827
          %v836 = vadd.f32 %v786, %v828
          %v837 = vadd.f32 %v787, %v829
          %v838 = vadd.f32 %v788, %v830
          %v839 = vadd.f32 %v789, %v831
          %v840 = vadd.f32 %v790, %v832
          %841 = vrot.lane.b32.xlu0 %v418, 96
          %v842 = vpop.permute.xlu0 %841
          %843 = vrot.lane.b32.xlu0 %v420, 96
          %v844 = vpop.permute.xlu0 %843
          %845 = vrot.lane.b32.xlu0 %v422, 96
          %v846 = vpop.permute.xlu0 %845
          %847 = vrot.lane.b32.xlu0 %v424, 96
          %v848 = vpop.permute.xlu0 %847
          %849 = vrot.lane.b32.xlu0 %v419, 96
          %v850 = vpop.permute.xlu0 %849
          %851 = vrot.lane.b32.xlu0 %v421, 96
          %v852 = vpop.permute.xlu0 %851
          %853 = vrot.lane.b32.xlu0 %v423, 96
          %v854 = vpop.permute.xlu0 %853
          %855 = vrot.lane.b32.xlu0 %v425, 96
          %v856 = vpop.permute.xlu0 %855
          %vm857 = vcmp.lt.s32.totalorder %v507, 96
          %v858 = vsel %vm857, %v842, %v850
          %v859 = vsel %vm857, %v844, %v852
          %v860 = vsel %vm857, %v846, %v854
          %v861 = vsel %vm857, %v848, %v856
          %v862 = vsel %vm857, %v850, %v842
          %v863 = vsel %vm857, %v852, %v844
          %v864 = vsel %vm857, %v854, %v846
          %v865 = vsel %vm857, %v856, %v848
          %s866 = scalar_lea.vmem [#allocation5], 448
          %v867 = vld [vmem:[%s866] sm:$0xff]
          %v868 = vld [vmem:[%s866 + $0x8] sm:$0xff]
          %v869 = vld [vmem:[%s866 + $0x10] sm:$0xff]
          %v870 = vld [vmem:[%s866 + $0x18] sm:$0xff]
          %v871 = vld [vmem:[%s866 + $0x20] sm:$0xff]
          %v872 = vld [vmem:[%s866 + $0x28] sm:$0xff]
          %v873 = vld [vmem:[%s866 + $0x30] sm:$0xff]
          %v874 = vld [vmem:[%s866 + $0x38] sm:$0xff]
          %v875 = vmul.f32 %v858, %v867
          %v876 = vmul.f32 %v862, %v868
          %v877 = vmul.f32 %v859, %v869
          %v878 = vmul.f32 %v863, %v870
          %v879 = vmul.f32 %v860, %v871
          %v880 = vmul.f32 %v864, %v872
          %v881 = vmul.f32 %v861, %v873
          %v882 = vmul.f32 %v865, %v874
          %v883 = vadd.f32 %v833, %v875
          %v884 = vadd.f32 %v834, %v876
          %v885 = vadd.f32 %v835, %v877
          %v886 = vadd.f32 %v836, %v878
          %v887 = vadd.f32 %v837, %v879
          %v888 = vadd.f32 %v838, %v880
          %v889 = vadd.f32 %v839, %v881
          %v890 = vadd.f32 %v840, %v882
          %v891 = vmax.f32 %v883, 0.0
          %v892 = vmax.f32 %v884, 0.0
          %v893 = vmax.f32 %v885, 0.0
          %v894 = vmax.f32 %v886, 0.0
          %v895 = vmax.f32 %v887, 0.0
          %v896 = vmax.f32 %v888, 0.0
          %v897 = vmax.f32 %v889, 0.0
          %v898 = vmax.f32 %v890, 0.0
          %v899 = vadd.f32 %v891, %v892
          %900 = vadd.xlane.f32.xlu0 %v899
          %v901 = vpop.xlane.xlu0 %900
          %v902 = vadd.f32 %v893, %v894
          %903 = vadd.xlane.f32.xlu0 %v902
          %v904 = vpop.xlane.xlu0 %903
          %v905 = vadd.f32 %v895, %v896
          %906 = vadd.xlane.f32.xlu0 %v905
          %v907 = vpop.xlane.xlu0 %906
          %v908 = vadd.f32 %v897, %v898
          %909 = vadd.xlane.f32.xlu0 %v908
          %v910 = vpop.xlane.xlu0 %909
          %v911 = vld [vmem:[%s4] sm:$0xff]
          %vm912 = vcmask 261120
          %v914 = vsel %vm912, %v911, 0
          %916 = vmatprep.subr.mxu0 0.0
          %917 = vmatpush1.msra.mxu0 %v901
          %918 = vmatprep.subr.mxu0 0.0
          %919 = vmatpush1.msra.mxu0 %v904
          %920 = vmatprep.subr.mxu0 0.0
          %921 = vmatpush1.msra.mxu0 %v907
          %922 = vmatprep.subr.mxu0 0.0
          %923 = vmatpush1.msra.mxu0 %v910
          %924 = vmatprep.subr.mxu0 0.0
          %925 = vmatpush1.msra.mxu0 0.0
          %926 = vmatprep.subr.mxu0 0.0
          %927 = vmatpush1.msra.mxu0 0.0
          %928 = vmatprep.subr.mxu0 0.0
          %929 = vmatpush1.msra.mxu0 0.0
          %930 = vmatprep.subr.mxu0 0.0
          %931 = vmatpush1.msra.mxu0 0.0
          %932 = vmatprep.subr.mxu0 0.0
          %933 = vmatpush1.msra.mxu0 0.0
          %934 = vmatprep.subr.mxu0 0.0
          %935 = vmatpush1.msra.mxu0 0.0
          %936 = vmatprep.subr.mxu0 0.0
          %937 = vmatpush1.msra.mxu0 0.0
          %938 = vmatprep.subr.mxu0 0.0
          %939 = vmatpush1.msra.mxu0 0.0
          %940 = vmatprep.subr.mxu0 0.0
          %941 = vmatpush1.msra.mxu0 0.0
          %942 = vmatprep.subr.mxu0 0.0
          %943 = vmatpush1.msra.mxu0 0.0
          %944 = vmatprep.subr.mxu0 0.0
          %945 = vmatpush1.msra.mxu0 0.0
          %946 = vmatprep.subr.mxu0 0.0
          %947 = vmatpush1.msra.mxu0 0.0
          %948 = vmatprep.subr.mxu0 0.0
          %949 = vmatpush1.msra.mxu0 0.0
          %950 = vmatprep.subr.mxu0 0.0
          %951 = vmatpush1.msra.mxu0 0.0
          %952 = vmatprep.subr.mxu0 0.0
          %953 = vmatpush1.msra.mxu0 0.0
          %954 = vmatprep.subr.mxu0 0.0
          %955 = vmatpush1.msra.mxu0 0.0
          %956 = vmatprep.subr.mxu0 0.0
          %957 = vmatpush1.msra.mxu0 0.0
          %958 = vmatprep.subr.mxu0 0.0
          %959 = vmatpush1.msra.mxu0 0.0
          %960 = vmatprep.subr.mxu0 0.0
          %961 = vmatpush1.msra.mxu0 0.0
          %962 = vmatprep.subr.mxu0 0.0
          %963 = vmatpush1.msra.mxu0 0.0
          %964 = vmatprep.subr.mxu0 0.0
          %965 = vmatpush1.msra.mxu0 0.0
          %966 = vmatprep.subr.mxu0 0.0
          %967 = vmatpush1.msra.mxu0 0.0
          %968 = vmatprep.subr.mxu0 0.0
          %969 = vmatpush1.msra.mxu0 0.0
          %970 = vmatprep.subr.mxu0 0.0
          %971 = vmatpush1.msra.mxu0 0.0
          %972 = vmatprep.subr.mxu0 0.0
          %973 = vmatpush1.msra.mxu0 0.0
          %974 = vmatprep.subr.mxu0 0.0
          %975 = vmatpush1.msra.mxu0 0.0
          %976 = vmatprep.subr.mxu0 0.0
          %977 = vmatpush1.msra.mxu0 0.0
          %978 = vmatprep.subr.mxu0 0.0
          %979 = vmatpush1.msra.mxu0 0.0
          %980 = vmatprep.mubr.f32.mxu0 0.0
          %981 = vmatmul.mubr.f32.gmra.mrb[0].mxu0 %v914
          %v982 = vpop.f32.mrb[0].mxu0
          %v983 = vadd.f32 0.0, %v982
          %v984 = vpop.f32.mrb[0].mxu0
          %985 = vdwg.mxu0
          %v986 = vmax.f32 %v983, 0.0
          %v987 = vld [vmem:[%s5] sm:$0xff]
          %v988 = vld [vmem:[%s5 + $0x8] sm:$0xff]
          %v989 = vld [vmem:[%s5 + $0x10] sm:$0xff]
          %v990 = vld [vmem:[%s5 + $0x18] sm:$0xff]
          %vm991 = vcmask 64512
          %v993 = vsel %vm991, %v987, 0
          %v996 = vsel %vm991, %v988, 0
          %v999 = vsel %vm991, %v989, 0
          %v1002 = vsel %vm991, %v990, 0
          %1004 = vmatprep.subr.mxu0 0.0
          %1005 = vmatpush1.msra.mxu0 %v986
          %1006 = vmatprep.subr.mxu0 0.0
          %1007 = vmatpush1.msra.mxu0 0.0
          %1008 = vmatprep.subr.mxu0 0.0
          %1009 = vmatpush1.msra.mxu0 0.0
          %1010 = vmatprep.subr.mxu0 0.0
          %1011 = vmatpush1.msra.mxu0 0.0
          %1012 = vmatprep.subr.mxu0 0.0
          %1013 = vmatpush1.msra.mxu0 0.0
          %1014 = vmatprep.subr.mxu0 0.0
          %1015 = vmatpush1.msra.mxu0 0.0
          %1016 = vmatprep.subr.mxu0 0.0
          %1017 = vmatpush1.msra.mxu0 0.0
          %1018 = vmatprep.subr.mxu0 0.0
          %1019 = vmatpush1.msra.mxu0 0.0
          %1020 = vmatprep.subr.mxu0 0.0
          %1021 = vmatpush1.msra.mxu0 0.0
          %1022 = vmatprep.subr.mxu0 0.0
          %1023 = vmatpush1.msra.mxu0 0.0
          %1024 = vmatprep.subr.mxu0 0.0
          %1025 = vmatpush1.msra.mxu0 0.0
          %1026 = vmatprep.subr.mxu0 0.0
          %1027 = vmatpush1.msra.mxu0 0.0
          %1028 = vmatprep.subr.mxu0 0.0
          %1029 = vmatpush1.msra.mxu0 0.0
          %1030 = vmatprep.subr.mxu0 0.0
          %1031 = vmatpush1.msra.mxu0 0.0
          %1032 = vmatprep.subr.mxu0 0.0
          %1033 = vmatpush1.msra.mxu0 0.0
          %1034 = vmatprep.subr.mxu0 0.0
          %1035 = vmatpush1.msra.mxu0 0.0
          %1036 = vmatprep.subr.mxu0 0.0
          %1037 = vmatpush1.msra.mxu0 0.0
          %1038 = vmatprep.subr.mxu0 0.0
          %1039 = vmatpush1.msra.mxu0 0.0
          %1040 = vmatprep.subr.mxu0 0.0
          %1041 = vmatpush1.msra.mxu0 0.0
          %1042 = vmatprep.subr.mxu0 0.0
          %1043 = vmatpush1.msra.mxu0 0.0
          %1044 = vmatprep.subr.mxu0 0.0
          %1045 = vmatpush1.msra.mxu0 0.0
          %1046 = vmatprep.subr.mxu0 0.0
          %1047 = vmatpush1.msra.mxu0 0.0
          %1048 = vmatprep.subr.mxu0 0.0
          %1049 = vmatpush1.msra.mxu0 0.0
          %1050 = vmatprep.subr.mxu0 0.0
          %1051 = vmatpush1.msra.mxu0 0.0
          %1052 = vmatprep.subr.mxu0 0.0
          %1053 = vmatpush1.msra.mxu0 0.0
          %1054 = vmatprep.subr.mxu0 0.0
          %1055 = vmatpush1.msra.mxu0 0.0
          %1056 = vmatprep.subr.mxu0 0.0
          %1057 = vmatpush1.msra.mxu0 0.0
          %1058 = vmatprep.subr.mxu0 0.0
          %1059 = vmatpush1.msra.mxu0 0.0
          %1060 = vmatprep.subr.mxu0 0.0
          %1061 = vmatpush1.msra.mxu0 0.0
          %1062 = vmatprep.subr.mxu0 0.0
          %1063 = vmatpush1.msra.mxu0 0.0
          %1064 = vmatprep.subr.mxu0 0.0
          %1065 = vmatpush1.msra.mxu0 0.0
          %1066 = vmatprep.subr.mxu0 0.0
          %1067 = vmatpush1.msra.mxu0 0.0
          %1068 = vmatprep.mubr.f32.mxu0 0.0
          %1069 = vmatmul.mubr.f32.gmra.mrb[0].mxu0 %v993
          %v1070 = vpop.f32.mrb[0].mxu0
          %v1071 = vadd.f32 0.0, %v1070
          %v1072 = vpop.f32.mrb[0].mxu0
          %1073 = vmatprep.mubr.f32.mxu0 0.0
          %1074 = vmatmul.mubr.f32.gmra.mrb[0].mxu0 %v996
          %v1075 = vpop.f32.mrb[0].mxu0
          %v1076 = vadd.f32 0.0, %v1075
          %v1077 = vpop.f32.mrb[0].mxu0
          %1078 = vmatprep.mubr.f32.mxu0 0.0
          %1079 = vmatmul.mubr.f32.gmra.mrb[0].mxu0 %v999
          %v1080 = vpop.f32.mrb[0].mxu0
          %v1081 = vadd.f32 0.0, %v1080
          %v1082 = vpop.f32.mrb[0].mxu0
          %1083 = vmatprep.mubr.f32.mxu0 0.0
          %1084 = vmatmul.mubr.f32.gmra.mrb[0].mxu0 %v1002
          %v1085 = vpop.f32.mrb[0].mxu0
          %v1086 = vadd.f32 0.0, %v1085
          %v1087 = vpop.f32.mrb[0].mxu0
          %1088 = vdwg.mxu0
          %v1089 = vsub.f32 0.0, %v1071
          %v1090 = vsub.f32 0.0, %v1076
          %v1091 = vsub.f32 0.0, %v1081
          %v1092 = vsub.f32 0.0, %v1086
          %v1093 = vmul.f32 %v1089, 1.442695
          %v1094 = vpow.pop %v1093
          %v1095 = vmul.f32 %v1090, 1.442695
          %v1096 = vpow.pop %v1095
          %v1097 = vmul.f32 %v1091, 1.442695
          %v1098 = vpow.pop %v1097
          %v1099 = vmul.f32 %v1092, 1.442695
          %v1100 = vpow.pop %v1099
          %v1101 = vadd.f32 %v1094, 1.0
          %v1102 = vadd.f32 %v1096, 1.0
          %v1103 = vadd.f32 %v1098, 1.0
          %v1104 = vadd.f32 %v1100, 1.0
          %v1105 = vrcp.pop %v1101
          %v1106 = vmul.f32 1.0, %v1105
          %v1107 = vrcp.pop %v1102
          %v1108 = vmul.f32 1.0, %v1107
          %v1109 = vrcp.pop %v1103
          %v1110 = vmul.f32 1.0, %v1109
          %v1111 = vrcp.pop %v1104
          %v1112 = vmul.f32 1.0, %v1111
          %1114 = vset.pattern.permute.xlu0 0
          %1115 = vperm.xlu0 %1114, %v1106
          %v1116 = vpop.permute.xlu0 %1115
          %1119 = vset.pattern.permute.xlu0 0
          %1120 = vperm.xlu0 %1119, %v1108
          %v1121 = vpop.permute.xlu0 %1120
          %1124 = vset.pattern.permute.xlu0 0
          %1125 = vperm.xlu0 %1124, %v1110
          %v1126 = vpop.permute.xlu0 %1125
          %1129 = vset.pattern.permute.xlu0 0
          %1130 = vperm.xlu0 %1129, %v1112
          %v1131 = vpop.permute.xlu0 %1130
          %v1133 = vmul.f32 %v891, %v1116
          %v1134 = vmul.f32 %v892, %v1116
          %v1135 = vmul.f32 %v893, %v1121
          %v1136 = vmul.f32 %v894, %v1121
          %v1137 = vmul.f32 %v895, %v1126
          %v1138 = vmul.f32 %v896, %v1126
          %v1139 = vmul.f32 %v897, %v1131
          %v1140 = vmul.f32 %v898, %v1131
          %v1141 = vpack.c.bf16 %v1135, %v1133
          %v1142 = vpack.c.bf16 %v1136, %v1134
          %v1143 = vpack.c.bf16 %v1139, %v1137
          %v1144 = vpack.c.bf16 %v1140, %v1138
          %v1145 = vld [vmem:[%s6] sm:$0xf]
          %v1146 = vld [vmem:[%s6 + $0x4] sm:$0xf]
          %v1147 = vld [vmem:[%s6 + $0x8] sm:$0xf]
          %v1148 = vld [vmem:[%s6 + $0xc] sm:$0xf]
          %v1149 = vld [vmem:[%s6 + $0x10] sm:$0xf]
          %v1150 = vld [vmem:[%s6 + $0x14] sm:$0xf]
          %v1151 = vld [vmem:[%s7] sm:$0xff]
          %v1152 = vld [vmem:[%s7 + $0x8] sm:$0xff]
          %v1153 = vld [vmem:[%s7 + $0x10] sm:$0xff]
          %v1154 = vld [vmem:[%s7 + $0x18] sm:$0xff]
          %v1155 = vld [vmem:[%s7 + $0x20] sm:$0xff]
          %v1156 = vld [vmem:[%s7 + $0x28] sm:$0xff]
          %1158 = vset.pattern.permute.xlu0 0
          %1159 = vperm.xlu0 %1158, %v1151
          %v1160 = vpop.permute.xlu0 %1159
          %1163 = vset.pattern.permute.xlu0 0
          %1164 = vperm.xlu0 %1163, %v1152
          %v1165 = vpop.permute.xlu0 %1164
          %1168 = vset.pattern.permute.xlu0 0
          %1169 = vperm.xlu0 %1168, %v1153
          %v1170 = vpop.permute.xlu0 %1169
          %1173 = vset.pattern.permute.xlu0 0
          %1174 = vperm.xlu0 %1173, %v1154
          %v1175 = vpop.permute.xlu0 %1174
          %1178 = vset.pattern.permute.xlu0 0
          %1179 = vperm.xlu0 %1178, %v1155
          %v1180 = vpop.permute.xlu0 %1179
          %1183 = vset.pattern.permute.xlu0 0
          %1184 = vperm.xlu0 %1183, %v1156
          %v1185 = vpop.permute.xlu0 %1184
          %v1193 = vunpack.c.l.b16 %v1145
          %v1194 = vunpack.c.l.b16 %v1146
          %v1195 = vunpack.c.l.b16 %v1147
          %v1196 = vunpack.c.l.b16 %v1148
          %v1197 = vunpack.c.l.b16 %v1149
          %v1198 = vunpack.c.l.b16 %v1150
          %v1199 = vpack.c.b16 %v1194, %v1193
          %v1200 = vpack.c.b16 %v1196, %v1195
          %v1201 = vpack.c.b16 %v1198, %v1197
          %v1203 = vsel %vm912, %v1199, 0
          %v1206 = vsel %vm912, %v1200, 0
          %v1209 = vsel %vm912, %v1201, 0
          %1211 = vmatprep.subr.bf16.mxu0 %v1142
          %1212 = vmatpush1.bf16.msra.mxu0 %v1141
          %1213 = vmatprep.subr.bf16.mxu0 %v1144
          %1214 = vmatpush1.bf16.msra.mxu0 %v1143
          %1215 = vmatprep.subr.bf16.mxu0 0
          %1216 = vmatpush1.bf16.msra.mxu0 0
          %1217 = vmatprep.subr.bf16.mxu0 0
          %1218 = vmatpush1.bf16.msra.mxu0 0
          %1219 = vmatprep.subr.bf16.mxu0 0
          %1220 = vmatpush1.bf16.msra.mxu0 0
          %1221 = vmatprep.subr.bf16.mxu0 0
          %1222 = vmatpush1.bf16.msra.mxu0 0
          %1223 = vmatprep.subr.bf16.mxu0 0
          %1224 = vmatpush1.bf16.msra.mxu0 0
          %1225 = vmatprep.subr.bf16.mxu0 0
          %1226 = vmatpush1.bf16.msra.mxu0 0
          %1227 = vmatprep.subr.bf16.mxu0 0
          %1228 = vmatpush1.bf16.msra.mxu0 0
          %1229 = vmatprep.subr.bf16.mxu0 0
          %1230 = vmatpush1.bf16.msra.mxu0 0
          %1231 = vmatprep.subr.bf16.mxu0 0
          %1232 = vmatpush1.bf16.msra.mxu0 0
          %1233 = vmatprep.subr.bf16.mxu0 0
          %1234 = vmatpush1.bf16.msra.mxu0 0
          %1235 = vmatprep.subr.bf16.mxu0 0
          %1236 = vmatpush1.bf16.msra.mxu0 0
          %1237 = vmatprep.subr.bf16.mxu0 0
          %1238 = vmatpush1.bf16.msra.mxu0 0
          %1239 = vmatprep.subr.bf16.mxu0 0
          %1240 = vmatpush1.bf16.msra.mxu0 0
          %1241 = vmatprep.subr.bf16.mxu0 0
          %1242 = vmatpush1.bf16.msra.mxu0 0
          %1243 = vmatprep.mubr.bf16.mxu0 0
          %1244 = vmatmul.mubr.bf16.gmra.mrb[0].mxu0 %v1203
          %v1245 = vpop.f32.mrb[0].mxu0
          %v1246 = vadd.f32 %v1160, %v1245
          %v1247 = vpop.f32.mrb[0].mxu0
          %v1248 = vadd.f32 %v1160, %v1247
          %v1249 = vpop.f32.mrb[0].mxu0
          %v1250 = vadd.f32 %v1165, %v1249
          %v1251 = vpop.f32.mrb[0].mxu0
          %v1252 = vadd.f32 %v1165, %v1251
          %1253 = vmatprep.mubr.bf16.mxu0 0
          %1254 = vmatmul.mubr.bf16.gmra.mrb[0].mxu0 %v1206
          %v1255 = vpop.f32.mrb[0].mxu0
          %v1256 = vadd.f32 %v1170, %v1255
          %v1257 = vpop.f32.mrb[0].mxu0
          %v1258 = vadd.f32 %v1170, %v1257
          %v1259 = vpop.f32.mrb[0].mxu0
          %v1260 = vadd.f32 %v1175, %v1259
          %v1261 = vpop.f32.mrb[0].mxu0
          %v1262 = vadd.f32 %v1175, %v1261
          %1263 = vmatprep.mubr.bf16.mxu0 0
          %1264 = vmatmul.mubr.bf16.gmra.mrb[0].mxu0 %v1209
          %v1265 = vpop.f32.mrb[0].mxu0
          %v1266 = vadd.f32 %v1180, %v1265
          %v1267 = vpop.f32.mrb[0].mxu0
          %v1268 = vadd.f32 %v1180, %v1267
          %v1269 = vpop.f32.mrb[0].mxu0
          %v1270 = vadd.f32 %v1185, %v1269
          %v1271 = vpop.f32.mrb[0].mxu0
          %v1272 = vadd.f32 %v1185, %v1271
          %1273 = vdwg.mxu0
          %v1274 = vmax.f32 %v1246, 0.0
          %v1275 = vmax.f32 %v1248, 0.0
          %v1276 = vmax.f32 %v1250, 0.0
          %v1277 = vmax.f32 %v1252, 0.0
          %v1278 = vmax.f32 %v1256, 0.0
          %v1279 = vmax.f32 %v1258, 0.0
          %v1280 = vmax.f32 %v1260, 0.0
          %v1281 = vmax.f32 %v1262, 0.0
          %v1282 = vmax.f32 %v1266, 0.0
          %v1283 = vmax.f32 %v1268, 0.0
          %v1284 = vmax.f32 %v1270, 0.0
          %v1285 = vmax.f32 %v1272, 0.0
          %s1286 = smul.u32 %s410, 12
          %s1287 = smul.addr %s1286, 8
          %s1288 = scalar_lea.vmem %s397, %s1287 [#allocation7]
          %1289 = vst [vmem:[%s1288] sm:$0xff] %v1274
          %1290 = vst [vmem:[%s1288 + $0x8] sm:$0xff] %v1275
          %1291 = vst [vmem:[%s1288 + $0x10] sm:$0xff] %v1276
          %1292 = vst [vmem:[%s1288 + $0x18] sm:$0xff] %v1277
          %1293 = vst [vmem:[%s1288 + $0x20] sm:$0xff] %v1278
          %1294 = vst [vmem:[%s1288 + $0x28] sm:$0xff] %v1279
          %1295 = vst [vmem:[%s1288 + $0x30] sm:$0xff] %v1280
          %1296 = vst [vmem:[%s1288 + $0x38] sm:$0xff] %v1281
          %1297 = vst [vmem:[%s1288 + $0x40] sm:$0xff] %v1282
          %1298 = vst [vmem:[%s1288 + $0x48] sm:$0xff] %v1283
          %1299 = vst [vmem:[%s1288 + $0x50] sm:$0xff] %v1284
          %1300 = vst [vmem:[%s1288 + $0x58] sm:$0xff] %v1285
          %1301 = vrot.lane.b32.xlu0 %v1274, 127
          %v1302 = vpop.permute.xlu0 %1301
          %1303 = vrot.lane.b32.xlu0 %v1276, 127
          %v1304 = vpop.permute.xlu0 %1303
          %1305 = vrot.lane.b32.xlu0 %v1278, 127
          %v1306 = vpop.permute.xlu0 %1305
          %1307 = vrot.lane.b32.xlu0 %v1280, 127
          %v1308 = vpop.permute.xlu0 %1307
          %1309 = vrot.lane.b32.xlu0 %v1282, 127
          %v1310 = vpop.permute.xlu0 %1309
          %1311 = vrot.lane.b32.xlu0 %v1284, 127
          %v1312 = vpop.permute.xlu0 %1311
          %1313 = vrot.lane.b32.xlu0 %v1275, 127
          %v1314 = vpop.permute.xlu0 %1313
          %1315 = vrot.lane.b32.xlu0 %v1277, 127
          %v1316 = vpop.permute.xlu0 %1315
          %1317 = vrot.lane.b32.xlu0 %v1279, 127
          %v1318 = vpop.permute.xlu0 %1317
          %1319 = vrot.lane.b32.xlu0 %v1281, 127
          %v1320 = vpop.permute.xlu0 %1319
          %1321 = vrot.lane.b32.xlu0 %v1283, 127
          %v1322 = vpop.permute.xlu0 %1321
          %1323 = vrot.lane.b32.xlu0 %v1285, 127
          %v1324 = vpop.permute.xlu0 %1323
          %v1325 = vsel %vm607, %v1302, %v1314
          %v1326 = vsel %vm607, %v1304, %v1316
          %v1327 = vsel %vm607, %v1306, %v1318
          %v1328 = vsel %vm607, %v1308, %v1320
          %v1329 = vsel %vm607, %v1310, %v1322
          %v1330 = vsel %vm607, %v1312, %v1324
          %v1331 = vsel %vm607, %v1314, %v1302
          %v1332 = vsel %vm607, %v1316, %v1304
          %v1333 = vsel %vm607, %v1318, %v1306
          %v1334 = vsel %vm607, %v1320, %v1308
          %v1335 = vsel %vm607, %v1322, %v1310
          %v1336 = vsel %vm607, %v1324, %v1312
          %v1337 = vmax.f32 %v1274, %v1325
          %v1338 = vmax.f32 %v1275, %v1331
          %v1339 = vmax.f32 %v1276, %v1326
          %v1340 = vmax.f32 %v1277, %v1332
          %v1341 = vmax.f32 %v1278, %v1327
          %v1342 = vmax.f32 %v1279, %v1333
          %v1343 = vmax.f32 %v1280, %v1328
          %v1344 = vmax.f32 %v1281, %v1334
          %v1345 = vmax.f32 %v1282, %v1329
          %v1346 = vmax.f32 %v1283, %v1335
          %v1347 = vmax.f32 %v1284, %v1330
          %v1348 = vmax.f32 %v1285, %v1336
          %1349 = vrot.lane.b32.xlu0 %v1337, 112
          %v1350 = vpop.permute.xlu0 %1349
          %1351 = vrot.lane.b32.xlu0 %v1339, 112
          %v1352 = vpop.permute.xlu0 %1351
          %1353 = vrot.lane.b32.xlu0 %v1341, 112
          %v1354 = vpop.permute.xlu0 %1353
          %1355 = vrot.lane.b32.xlu0 %v1343, 112
          %v1356 = vpop.permute.xlu0 %1355
          %1357 = vrot.lane.b32.xlu0 %v1345, 112
          %v1358 = vpop.permute.xlu0 %1357
          %1359 = vrot.lane.b32.xlu0 %v1347, 112
          %v1360 = vpop.permute.xlu0 %1359
          %1361 = vrot.lane.b32.xlu0 %v1338, 112
          %v1362 = vpop.permute.xlu0 %1361
          %1363 = vrot.lane.b32.xlu0 %v1340, 112
          %v1364 = vpop.permute.xlu0 %1363
          %1365 = vrot.lane.b32.xlu0 %v1342, 112
          %v1366 = vpop.permute.xlu0 %1365
          %1367 = vrot.lane.b32.xlu0 %v1344, 112
          %v1368 = vpop.permute.xlu0 %1367
          %1369 = vrot.lane.b32.xlu0 %v1346, 112
          %v1370 = vpop.permute.xlu0 %1369
          %1371 = vrot.lane.b32.xlu0 %v1348, 112
          %v1372 = vpop.permute.xlu0 %1371
          %v1373 = vsel %vm807, %v1350, %v1362
          %v1374 = vsel %vm807, %v1352, %v1364
          %v1375 = vsel %vm807, %v1354, %v1366
          %v1376 = vsel %vm807, %v1356, %v1368
          %v1377 = vsel %vm807, %v1358, %v1370
          %v1378 = vsel %vm807, %v1360, %v1372
          %v1379 = vsel %vm807, %v1362, %v1350
          %v1380 = vsel %vm807, %v1364, %v1352
          %v1381 = vsel %vm807, %v1366, %v1354
          %v1382 = vsel %vm807, %v1368, %v1356
          %v1383 = vsel %vm807, %v1370, %v1358
          %v1384 = vsel %vm807, %v1372, %v1360
          %v1385 = vmax.f32 %v1337, %v1373
          %v1386 = vmax.f32 %v1338, %v1379
          %v1387 = vmax.f32 %v1339, %v1374
          %v1388 = vmax.f32 %v1340, %v1380
          %v1389 = vmax.f32 %v1341, %v1375
          %v1390 = vmax.f32 %v1342, %v1381
          %v1391 = vmax.f32 %v1343, %v1376
          %v1392 = vmax.f32 %v1344, %v1382
          %v1393 = vmax.f32 %v1345, %v1377
          %v1394 = vmax.f32 %v1346, %v1383
          %v1395 = vmax.f32 %v1347, %v1378
          %v1396 = vmax.f32 %v1348, %v1384
          %v1397 = vpack.c.bf16 %v1387, %v1385
          %v1398 = vpack.c.bf16 %v1388, %v1386
          %v1399 = vpack.c.bf16 %v1391, %v1389
          %v1400 = vpack.c.bf16 %v1392, %v1390
          %v1401 = vpack.c.bf16 %v1395, %v1393
          %v1402 = vpack.c.bf16 %v1396, %v1394
          %v1403 = vld [vmem:[%s8] sm:$0xf]
          %v1404 = vld [vmem:[%s8 + $0x4] sm:$0xf]
          %v1405 = vld [vmem:[%s8 + $0x8] sm:$0xf]
          %v1406 = vld [vmem:[%s8 + $0xc] sm:$0xf]
          %v1407 = vld [vmem:[%s8 + $0x10] sm:$0xf]
          %v1408 = vld [vmem:[%s8 + $0x14] sm:$0xf]
          %v1409 = vld [vmem:[%s8 + $0x18] sm:$0xf]
          %v1410 = vld [vmem:[%s8 + $0x1c] sm:$0xf]
          %v1411 = vld [vmem:[%s8 + $0x20] sm:$0xf]
          %v1412 = vld [vmem:[%s8 + $0x24] sm:$0xf]
          %v1413 = vld [vmem:[%s8 + $0x28] sm:$0xf]
          %v1414 = vld [vmem:[%s8 + $0x2c] sm:$0xf]
          %v1415 = vld [vmem:[%s8 + $0x30] sm:$0xf]
          %v1416 = vld [vmem:[%s8 + $0x34] sm:$0xf]
          %v1417 = vld [vmem:[%s8 + $0x38] sm:$0xf]
          %v1418 = vld [vmem:[%s8 + $0x3c] sm:$0xf]
          %v1419 = vld [vmem:[%s8 + $0x40] sm:$0xf]
          %v1420 = vld [vmem:[%s8 + $0x44] sm:$0xf]
          %v1421 = vld [vmem:[%s8 + $0x48] sm:$0xf]
          %v1422 = vld [vmem:[%s8 + $0x4c] sm:$0xf]
          %v1423 = vld [vmem:[%s8 + $0x50] sm:$0xf]
          %v1424 = vld [vmem:[%s8 + $0x54] sm:$0xf]
          %v1425 = vld [vmem:[%s8 + $0x58] sm:$0xf]
          %v1426 = vld [vmem:[%s8 + $0x5c] sm:$0xf]
          %v1427 = vld [vmem:[%s8 + $0x60] sm:$0xf]
          %v1428 = vld [vmem:[%s8 + $0x64] sm:$0xf]
          %v1429 = vld [vmem:[%s8 + $0x68] sm:$0xf]
          %v1430 = vld [vmem:[%s8 + $0x6c] sm:$0xf]
          %v1431 = vld [vmem:[%s8 + $0x70] sm:$0xf]
          %v1432 = vld [vmem:[%s8 + $0x74] sm:$0xf]
          %v1433 = vld [vmem:[%s8 + $0x78] sm:$0xf]
          %v1434 = vld [vmem:[%s8 + $0x7c] sm:$0xf]
          %v1467 = vunpack.c.l.b16 %v1403
          %v1468 = vunpack.c.l.b16 %v1404
          %v1469 = vunpack.c.l.b16 %v1405
          %v1470 = vunpack.c.l.b16 %v1406
          %v1471 = vunpack.c.l.b16 %v1407
          %v1472 = vunpack.c.l.b16 %v1408
          %v1473 = vunpack.c.l.b16 %v1409
          %v1474 = vunpack.c.l.b16 %v1410
          %v1475 = vunpack.c.l.b16 %v1411
          %v1476 = vunpack.c.l.b16 %v1412
          %v1477 = vunpack.c.l.b16 %v1413
          %v1478 = vunpack.c.l.b16 %v1414
          %v1479 = vunpack.c.l.b16 %v1415
          %v1480 = vunpack.c.l.b16 %v1416
          %v1481 = vunpack.c.l.b16 %v1417
          %v1482 = vunpack.c.l.b16 %v1418
          %v1483 = vunpack.c.l.b16 %v1419
          %v1484 = vunpack.c.l.b16 %v1420
          %v1485 = vunpack.c.l.b16 %v1421
          %v1486 = vunpack.c.l.b16 %v1422
          %v1487 = vunpack.c.l.b16 %v1423
          %v1488 = vunpack.c.l.b16 %v1424
          %v1489 = vunpack.c.l.b16 %v1425
          %v1490 = vunpack.c.l.b16 %v1426
          %v1491 = vunpack.c.l.b16 %v1427
          %v1492 = vunpack.c.l.b16 %v1428
          %v1493 = vunpack.c.l.b16 %v1429
          %v1494 = vunpack.c.l.b16 %v1430
          %v1495 = vunpack.c.l.b16 %v1431
          %v1496 = vunpack.c.l.b16 %v1432
          %v1497 = vunpack.c.l.b16 %v1433
          %v1498 = vunpack.c.l.b16 %v1434
          %v1499 = vpack.c.b16 %v1468, %v1467
          %v1500 = vpack.c.b16 %v1470, %v1469
          %v1501 = vpack.c.b16 %v1472, %v1471
          %v1502 = vpack.c.b16 %v1474, %v1473
          %v1503 = vpack.c.b16 %v1476, %v1475
          %v1504 = vpack.c.b16 %v1478, %v1477
          %v1505 = vpack.c.b16 %v1480, %v1479
          %v1506 = vpack.c.b16 %v1482, %v1481
          %v1507 = vpack.c.b16 %v1484, %v1483
          %v1508 = vpack.c.b16 %v1486, %v1485
          %v1509 = vpack.c.b16 %v1488, %v1487
          %v1510 = vpack.c.b16 %v1490, %v1489
          %v1511 = vpack.c.b16 %v1492, %v1491
          %v1512 = vpack.c.b16 %v1494, %v1493
          %v1513 = vpack.c.b16 %v1496, %v1495
          %v1514 = vpack.c.b16 %v1498, %v1497
          %1531 = vmatprep.subr.bf16.mxu0 0
          %1532 = vmatpush1.bf16.msra.mxu0 %v1499
          %1533 = vmatprep.subr.bf16.mxu0 0
          %1534 = vmatpush1.bf16.msra.mxu0 %v1500
          %1535 = vmatprep.subr.bf16.mxu0 0
          %1536 = vmatpush1.bf16.msra.mxu0 %v1501
          %1537 = vmatprep.subr.bf16.mxu0 0
          %1538 = vmatpush1.bf16.msra.mxu0 %v1502
          %1539 = vmatprep.subr.bf16.mxu0 0
          %1540 = vmatpush1.bf16.msra.mxu0 %v1503
          %1541 = vmatprep.subr.bf16.mxu0 0
          %1542 = vmatpush1.bf16.msra.mxu0 %v1504
          %1543 = vmatprep.subr.bf16.mxu0 0
          %1544 = vmatpush1.bf16.msra.mxu0 %v1505
          %1545 = vmatprep.subr.bf16.mxu0 0
          %1546 = vmatpush1.bf16.msra.mxu0 %v1506
          %1547 = vmatprep.subr.bf16.mxu0 0
          %1548 = vmatpush1.bf16.msra.mxu0 %v1507
          %1549 = vmatprep.subr.bf16.mxu0 0
          %1550 = vmatpush1.bf16.msra.mxu0 %v1508
          %1551 = vmatprep.subr.bf16.mxu0 0
          %1552 = vmatpush1.bf16.msra.mxu0 %v1509
          %1553 = vmatprep.subr.bf16.mxu0 0
          %1554 = vmatpush1.bf16.msra.mxu0 %v1510
          %1555 = vmatprep.subr.bf16.mxu0 0
          %1556 = vmatpush1.bf16.msra.mxu0 %v1511
          %1557 = vmatprep.subr.bf16.mxu0 0
          %1558 = vmatpush1.bf16.msra.mxu0 %v1512
          %1559 = vmatprep.subr.bf16.mxu0 0
          %1560 = vmatpush1.bf16.msra.mxu0 %v1513
          %1561 = vmatprep.subr.bf16.mxu0 0
          %1562 = vmatpush1.bf16.msra.mxu0 %v1514
          %1563 = vmatprep.mubr.bf16.mxu0 %v1398
          %1564 = vmatmul.mubr.bf16.gmra.mrb[0].mxu0 %v1397
          %v1565 = vpop.f32.mrb[0].mxu0
          %v1566 = vadd.f32 0.0, %v1565
          %v1567 = vpop.f32.mrb[0].mxu0
          %v1568 = vpop.f32.mrb[0].mxu0
          %v1569 = vadd.f32 0.0, %v1568
          %v1570 = vpop.f32.mrb[0].mxu0
          %1571 = vmatprep.mubr.bf16.mxu0 %v1400
          %1572 = vmatmul.mubr.bf16.gmra.mrb[0].mxu0 %v1399
          %v1573 = vpop.f32.mrb[0].mxu0
          %v1574 = vadd.f32 0.0, %v1573
          %v1575 = vpop.f32.mrb[0].mxu0
          %v1576 = vpop.f32.mrb[0].mxu0
          %v1577 = vadd.f32 0.0, %v1576
          %v1578 = vpop.f32.mrb[0].mxu0
          %1579 = vmatprep.mubr.bf16.mxu0 %v1402
          %1580 = vmatmul.mubr.bf16.gmra.mrb[0].mxu0 %v1401
          %v1581 = vpop.f32.mrb[0].mxu0
          %v1582 = vadd.f32 0.0, %v1581
          %v1583 = vpop.f32.mrb[0].mxu0
          %v1584 = vpop.f32.mrb[0].mxu0
          %v1585 = vadd.f32 0.0, %v1584
          %v1586 = vpop.f32.mrb[0].mxu0
          %1587 = vdwg.mxu0
          %s1588 = smul.u32 %s410, 48
          %s1589 = scalar_lea.vmem %s404, %s1588 [#allocation8]
          %vm1590 = vcmask 523264
          %1591 = vst.msk [vmem:[%s1589] sm:$0xff] %vm1590, %v1566
          %1592 = vst.msk [vmem:[%s1589 + $0x8] sm:$0xff] %vm1590, %v1569
          %1593 = vst.msk [vmem:[%s1589 + $0x10] sm:$0xff] %vm1590, %v1574
          %1594 = vst.msk [vmem:[%s1589 + $0x18] sm:$0xff] %vm1590, %v1577
          %1595 = vst.msk [vmem:[%s1589 + $0x20] sm:$0xff] %vm1590, %v1582
          %1596 = vst.msk [vmem:[%s1589 + $0x28] sm:$0xff] %vm1590, %v1585
        $region69: #{tpu_custom_call.1} parent=55 // loop_footer
          %s414 = sadd.s32 1, %s410
        $region70: #{tpu_custom_call.1} parent=55 // loop_footer_branch
          %409 = sbr.rel target = $region66
        $region71: #{tpu_custom_call.1} parent=55 // loop_exit
          _
        %s1597 = sand.u32 %s234, 1
        %s1598 = scalar_lea.sflag [#allocation4], %s1597
        %s1599 = sand.u32 %s234, 1
        %s1600 = smul.addr %s1599, 192
        %s1601 = scalar_lea.vmem [#allocation7], %s1600
        %s1602 = sand.u32 %s260, 1
        %s1603 = scalar_lea.sflag [#allocation9], %s1602
        %s1604 = sand.u32 %s260, 1
        %s1605 = smul.addr %s1604, 96
        %s1606 = scalar_lea.vmem [#allocation8], %s1605
        // Predicated region
        $region72: #{tpu_custom_call.1} parent=55 // pred_check
          %p1607 = pneg %p244
        $region73: #{tpu_custom_call.1} parent=55 // pred_check_branch
          %1609 = sbr.rel (%p1607) target = $region75
        $region74: #{tpu_custom_call.1} parent=55 // pred_region
          %s1610 = smul.u32 2, %s32
          %s1612 = ssub.s32 3072, 3072
          %1613 = vsyncadd %s1598, %s1612
          %s1614 = smul.addr %s1610, 12
          %s1615 = smul.addr %s1614, 128
          %s1616 = scalar_lea.hbm %s9, %s1615
          %s1617 = sshll.u32 %s1601, 4
          %s1618 = int_to_ptr.vmem [resolvable:$true] %s1617
          %1623 = dma.vmem_to_hbm [thread:$0]  %s1618, 3072, %s1616, %s1598, 256, 256, 16
        $region75: #{tpu_custom_call.1} parent=55 // pred_fallthru
          _
        // Predicated region
        $region76: #{tpu_custom_call.1} parent=55 // pred_check
          %p1624 = pneg %p270
        $region77: #{tpu_custom_call.1} parent=55 // pred_check_branch
          %1626 = sbr.rel (%p1624) target = $region79
        $region78: #{tpu_custom_call.1} parent=55 // pred_region
          %s1627 = smul.u32 2, %s32
          %s1629 = ssub.s32 1536, 1536
          %1630 = vsyncadd %s1603, %s1629
          %s1631 = smul.addr %s1627, 6
          %s1632 = smul.addr %s1631, 128
          %s1633 = scalar_lea.hbm %s10, %s1632
          %s1634 = sshll.u32 %s1606, 4
          %s1635 = int_to_ptr.vmem [resolvable:$true] %s1634
          %1640 = dma.vmem_to_hbm [thread:$0]  %s1635, 1536, %s1633, %s1603, 128, 128, 8
        $region79: #{tpu_custom_call.1} parent=55 // pred_fallthru
          _
      $region56: #{tpu_custom_call.1} parent=5 // pred_fallthru
        _
      %p1641 = scmp.le.s32.totalorder 2, %s27
      // Predicated region
      $region80: #{tpu_custom_call.1} parent=5 // pred_check
        %p1642 = pneg %p1641
      $region81: #{tpu_custom_call.1} parent=5 // pred_check_branch
        %1644 = sbr.rel (%p1642) target = $region83
      $region82: #{tpu_custom_call.1} parent=5 // pred_region
        %s1645 = ssub.s32 %s27, 2
        // Predicated region
        $region84: #{tpu_custom_call.1} parent=82 // pred_check
          %p1646 = pneg %p250
        $region85: #{tpu_custom_call.1} parent=82 // pred_check_branch
          %1648 = sbr.rel (%p1646) target = $region87
        $region86: #{tpu_custom_call.1} parent=82 // pred_region
          %s1649 = sand.u32 %s235, 1
          %s1650 = scalar_lea.sflag [#allocation4], %s1649
          %s1651 = sand.u32 %s235, 1
          %s1652 = smul.addr %s1651, 192
          %s1653 = scalar_lea.vmem [#allocation7], %s1652
          %1654 = dma.done %s1650, 3072
        $region87: #{tpu_custom_call.1} parent=82 // pred_fallthru
          _
        // Predicated region
        $region88: #{tpu_custom_call.1} parent=82 // pred_check
          %p1655 = pneg %p276
        $region89: #{tpu_custom_call.1} parent=82 // pred_check_branch
          %1657 = sbr.rel (%p1655) target = $region91
        $region90: #{tpu_custom_call.1} parent=82 // pred_region
          %s1658 = sand.u32 %s261, 1
          %s1659 = scalar_lea.sflag [#allocation9], %s1658
          %s1660 = sand.u32 %s261, 1
          %s1661 = smul.addr %s1660, 96
          %s1662 = scalar_lea.vmem [#allocation8], %s1661
          %1663 = dma.done %s1659, 1536
        $region91: #{tpu_custom_call.1} parent=82 // pred_fallthru
          _
      $region83: #{tpu_custom_call.1} parent=5 // pred_fallthru
        _
    $region6: #{tpu_custom_call.1} parent=1 // loop_footer
      %s31 = sadd.s32 1, %s27
    $region7: #{tpu_custom_call.1} parent=1 // loop_footer_branch
      %26 = sbr.rel target = $region3
    $region8: #{tpu_custom_call.1} parent=1 // loop_exit
      _
    %1664 = vsyncpa [#allocation3], 1
    %s1665 = scalar_lea.sflag [#allocation3], 1
    %1666 = vsyncpa %s1665, 1
    %1667 = vsyncpa [#allocation6], 1
    %1668 = vsyncpa [#allocation4], 1
    %s1669 = scalar_lea.sflag [#allocation4], 1
    %1670 = vsyncpa %s1669, 1
    %1671 = vsyncpa [#allocation9], 1
    %s1672 = scalar_lea.sflag [#allocation9], 1
    %1673 = vsyncpa %s1672, 1

</llo_original>
